<compile_context>
chip_gen: v6e
topology: v6e:2x2x1
jax: 0.10.0
libtpu: 0.0.40
codegen_flags: <defaults>
</compile_context>

<pallas_src>
import functools
import math

import jax
import jax.numpy as jnp
from jax.experimental import pallas as pl
from jax.experimental.pallas import tpu as pltpu

NEG_INF = -100000.0
LN_EPS = 1e-5


def encoder_layer_kernel(x_ref, mask_ref,
                         ln1g_ref, ln1b_ref,
                         wqkv_ref, bqkv_ref, wo_ref, bo_ref,
                         ln2g_ref, ln2b_ref,
                         w1_ref, b1_ref, w2_ref, b2_ref,
                         out_ref,
                         *, n_seq, bt, n_heads, embed_dim, compute_dtype):
    E = embed_dim
    d = E // n_heads
    M = n_seq * bt
    inv_e = 1.0 / E
    scale = 1.0 / math.sqrt(E)   # module scales by sqrt(embed_dim), not head_dim

    # ---- batch-major (M, E) activation slab --------------------------------
    # x block is (n, bt, E); rows [j*n, (j+1)*n) of the slab hold batch elem j.
    x3 = x_ref[...]
    if bt == 1:
        x2 = x3.reshape(M, E)
    else:
        x2 = jnp.concatenate([x3[:, j, :] for j in range(bt)], axis=0)

    def layer_norm(v, g, b):
        mean = jnp.sum(v, axis=-1, keepdims=True) * inv_e
        c = v - mean
        var = jnp.sum(c * c, axis=-1, keepdims=True) * inv_e   # centered form
        return c * jax.lax.rsqrt(var + LN_EPS) * g + b

    # ---- self-attention sub-layer ------------------------------------------
    xn = layer_norm(x2, ln1g_ref[...], ln1b_ref[...])
    xn_c = xn.astype(compute_dtype)                      # cast once per slab

    # fused QKV: one (M, E) x (E, 3E) MXU matmul, f32 accumulation
    qkv = jnp.dot(xn_c, wqkv_ref[...],
                  preferred_element_type=jnp.float32) + bqkv_ref[...]
    q = (qkv[:, 0:E] * scale).astype(compute_dtype).reshape(bt, n_seq, E)
    k = qkv[:, E:2 * E].astype(compute_dtype).reshape(bt, n_seq, E)
    v = qkv[:, 2 * E:3 * E].astype(compute_dtype).reshape(bt, n_seq, E)

    pad = (mask_ref[...] > 0.5).reshape(bt, 1, n_seq)    # key-axis padding mask

    pooled_heads = []
    for h in range(n_heads):                 # static loop; lane slices only
        hs = slice(h * d, (h + 1) * d)
        qh, kh, vh = q[:, :, hs], k[:, :, hs], v[:, :, hs]      # (bt, n, d)
        s = jnp.einsum('bmd,bnd->bmn', qh, kh,
                       preferred_element_type=jnp.float32)      # (bt, n, n)
        s = jnp.where(pad, NEG_INF, s)
        s_max = jnp.max(s, axis=-1, keepdims=True)
        ex = jnp.exp(s - s_max)
        den = jnp.sum(ex, axis=-1, keepdims=True)
        w = (ex / den).astype(compute_dtype)             # exact reciprocal
        ph = jnp.einsum('bmn,bnd->bmd', w, vh,
                        preferred_element_type=jnp.float32)     # (bt, n, d)
        pooled_heads.append(ph.reshape(M, d))

    pooled = (pooled_heads[0] if n_heads == 1
              else jnp.concatenate(pooled_heads, axis=-1))      # (M, E)

    # output projection: ONE (M, E) x (E, E) matmul (matches Wo row ordering)
    att = jnp.dot(pooled.astype(compute_dtype), wo_ref[...],
                  preferred_element_type=jnp.float32) + bo_ref[...]

    x1 = x2 + att                                        # residual 1

    # ---- feed-forward sub-layer --------------------------------------------
    x1n_c = layer_norm(x1, ln2g_ref[...], ln2b_ref[...]).astype(compute_dtype)
    hid = jnp.maximum(
        jnp.dot(x1n_c, w1_ref[...], preferred_element_type=jnp.float32)
        + b1_ref[...], 0.0)
    ff = jnp.dot(hid.astype(compute_dtype), w2_ref[...],
                 preferred_element_type=jnp.float32) + b2_ref[...]
    y = x1 + ff                                          # residual 2, (M, E)

    # ---- write back in the block's (n, bt, E) layout ------------------------
    if bt == 1:
        out_ref[...] = y.reshape(out_ref.shape)
    else:
        y3 = jnp.stack([y[j * n_seq:(j + 1) * n_seq, :] for j in range(bt)],
                       axis=1)                           # (n, bt, E)
        out_ref[...] = y3


def encoder_layer_pallas(x_nbe, src_mask_nb, params, *, n_heads,
                         batch_tiles=1, compute_dtype=jnp.float32):
    """x_nbe: (n, b, E) float32 (PyTorch layout); src_mask_nb: (n, b) bool."""
    n, b, e = x_nbe.shape
    hdim = params["w1"].shape[1]
    assert e % n_heads == 0
    if b % batch_tiles != 0:
        batch_tiles = 1
    bt = b // batch_tiles

    # One-time weight packing (parameter-load-time work in a real model):
    # fused (E, 3E) QKV slab, plain 2-D Wo/W1/W2, optional bf16 cast in HBM.
    wqkv = jnp.concatenate([params["wq"], params["wk"], params["wv"]],
                           axis=1).astype(compute_dtype)
    bqkv = jnp.concatenate([params["bq"], params["bk"], params["bv"]], axis=1)
    wo = params["wo"].astype(compute_dtype)
    w1 = params["w1"].astype(compute_dtype)
    w2 = params["w2"].astype(compute_dtype)

    # tiny one-time mask transpose (b*n scalars); no HBM transpose of x / out
    mask_bn = jnp.transpose(src_mask_nb, (1, 0)).astype(jnp.float32)   # (b, n)

    def rep(shape):     # grid-invariant parameter: same full block every step
        nd = len(shape)
        return pl.BlockSpec(shape, lambda i, _nd=nd: (0,) * _nd)

    in_specs = [
        pl.BlockSpec((n, bt, e), lambda i: (0, i, 0)),    # x (batch-sliced)
        pl.BlockSpec((bt, n), lambda i: (i, 0)),          # padding mask
        rep((1, e)), rep((1, e)),                         # ln1 gamma / beta
        rep((e, 3 * e)), rep((1, 3 * e)),                 # fused Wqkv, bqkv
        rep((e, e)), rep((1, e)),                         # Wo, bo
        rep((1, e)), rep((1, e)),                         # ln2 gamma / beta
        rep((e, hdim)), rep((1, hdim)),                   # W1, b1
        rep((hdim, e)), rep((1, e)),                      # W2, b2
    ]
    out_spec = pl.BlockSpec((n, bt, e), lambda i: (0, i, 0))

    kern = functools.partial(encoder_layer_kernel,
                             n_seq=n, bt=bt, n_heads=n_heads,
                             embed_dim=e, compute_dtype=compute_dtype)

    return pl.pallas_call(
        kern,
        out_shape=jax.ShapeDtypeStruct((n, b, e), jnp.float32),
        grid=(batch_tiles,),
        in_specs=in_specs,
        out_specs=out_spec,
        compiler_params=pltpu.CompilerParams(
            dimension_semantics=("parallel",),
            vmem_limit_bytes=32 * 1024 * 1024),
    )(
        x_nbe, mask_bn,
        params["ln1_g"], params["ln1_b"],
        wqkv, bqkv, wo, params["bo"],
        params["ln2_g"], params["ln2_b"],
        w1, params["b1"], w2, params["b2"],
    )


# ---------------------------------------------------------------------------
# pure-JAX reference (mirrors the PyTorch forward), evaluated at HIGHEST
# matmul precision so it is a trustworthy ground truth on TPU.
# ---------------------------------------------------------------------------
def encoder_layer_ref(x, src_mask, p, *, n_heads):
    n, b, e = x.shape
    d = e // n_heads
    hp = jax.lax.Precision.HIGHEST

    def ln(v, g, b_):
        mean = jnp.mean(v, axis=-1, keepdims=True)
        var = jnp.mean((v - mean) ** 2, axis=-1, keepdims=True)
        return (v - mean) / jnp.sqrt(var + LN_EPS) * g[0] + b_[0]

    xn = ln(x, p["ln1_g"], p["ln1_b"])
    q = (jnp.dot(xn, p["wq"], precision=hp) + p["bq"][0]).reshape(n, b, n_heads, d)
    k = (jnp.dot(xn, p["wk"], precision=hp) + p["bk"][0]).reshape(n, b, n_heads, d)
    v = (jnp.dot(xn, p["wv"], precision=hp) + p["bv"][0]).reshape(n, b, n_heads, d)
    scores = jnp.einsum("mbhd,nbhd->mnbh", q, k, precision=hp) / math.sqrt(e)
    mask = src_mask.reshape(1, n, b, 1)
    scores = jnp.where(mask, NEG_INF, scores)
    w = jax.nn.softmax(scores, axis=1)
    pooled = jnp.einsum("mnbh,nbhd->mbhd", w, v, precision=hp).reshape(n, b, e)
    att = jnp.dot(pooled, p["wo"], precision=hp) + p["bo"][0]
    x1 = x + att
    x1n = ln(x1, p["ln2_g"], p["ln2_b"])
    h = jnp.maximum(jnp.dot(x1n, p["w1"], precision=hp) + p["b1"][0], 0.0)
    return x1 + jnp.dot(h, p["w2"], precision=hp) + p["b2"][0]


def xavier(key, fan_in, fan_out):
    bound = math.sqrt(6.0 / (fan_in + fan_out))
    # stored as (in, out) so the kernel computes x @ W  (== PyTorch x @ W.T)
    return jax.random.uniform(key, (fan_in, fan_out), jnp.float32, -bound, bound)


if __name__ == "__main__":
    # small shapes consistent with the module: seq n=8, batch b=2, embed=32
    n, b, embed_dim, n_heads, hidden_dim = 8, 2, 32, 4, 64

    key = jax.random.PRNGKey(0)
    ks = jax.random.split(key, 10)

    params = {
        "ln1_g": jnp.ones((1, embed_dim), jnp.float32),
        "ln1_b": jnp.zeros((1, embed_dim), jnp.float32),
        "wq": xavier(ks[0], embed_dim, embed_dim),
        "bq": jnp.zeros((1, embed_dim), jnp.float32),
        "wk": xavier(ks[1], embed_dim, embed_dim),
        "bk": jnp.zeros((1, embed_dim), jnp.float32),
        "wv": xavier(ks[2], embed_dim, embed_dim),
        "bv": jnp.zeros((1, embed_dim), jnp.float32),
        "wo": xavier(ks[3], embed_dim, embed_dim),
        "bo": jnp.zeros((1, embed_dim), jnp.float32),
        "ln2_g": jnp.ones((1, embed_dim), jnp.float32),
        "ln2_b": jnp.zeros((1, embed_dim), jnp.float32),
        "w1": xavier(ks[4], embed_dim, hidden_dim),
        "b1": jnp.zeros((1, hidden_dim), jnp.float32),
        "w2": xavier(ks[5], hidden_dim, embed_dim),
        "b2": jnp.zeros((1, embed_dim), jnp.float32),
    }

    x = jax.random.normal(ks[6], (n, b, embed_dim), jnp.float32)
    # mask the last two positions of batch element 1 (True = padding)
    src_mask = jnp.zeros((n, b), jnp.bool_).at[n - 2:, 1].set(True)

    out = encoder_layer_pallas(x, src_mask, params, n_heads=n_heads)
    jax.block_until_ready(out)
    assert out.shape == (n, b, embed_dim)

    ref = encoder_layer_ref(x, src_mask, params, n_heads=n_heads)
    # Tolerance note: the reference runs at Precision.HIGHEST; the in-kernel
    # f32 MXU matmuls run at the backend's default precision, which may round
    # operands to bf16, so allow a ~1e-2 gap accumulated over 5 matmul stages.
    max_err = float(jnp.max(jnp.abs(out - ref)))
    assert jnp.allclose(out, ref, atol=2e-2, rtol=2e-2), f"mismatch: {max_err}"

    print("KERNEL_OK")
</pallas_src>

<mosaic_0001>
module attributes {stable_mosaic.version = 11 : i64} {
  func.func @encoder_layer_kernel(%arg0: i32, %arg1: memref<8x2x32xf32, #tpu.memory_space<vmem>>, %arg2: memref<2x8xf32, #tpu.memory_space<vmem>>, %arg3: memref<1x32xf32, #tpu.memory_space<vmem>>, %arg4: memref<1x32xf32, #tpu.memory_space<vmem>>, %arg5: memref<32x96xf32, #tpu.memory_space<vmem>>, %arg6: memref<1x96xf32, #tpu.memory_space<vmem>>, %arg7: memref<32x32xf32, #tpu.memory_space<vmem>>, %arg8: memref<1x32xf32, #tpu.memory_space<vmem>>, %arg9: memref<1x32xf32, #tpu.memory_space<vmem>>, %arg10: memref<1x32xf32, #tpu.memory_space<vmem>>, %arg11: memref<32x64xf32, #tpu.memory_space<vmem>>, %arg12: memref<1x64xf32, #tpu.memory_space<vmem>>, %arg13: memref<64x32xf32, #tpu.memory_space<vmem>>, %arg14: memref<1x32xf32, #tpu.memory_space<vmem>>, %arg15: memref<8x2x32xf32, #tpu.memory_space<vmem>>) attributes {dimension_semantics = [#tpu.dimension_semantics<parallel>], iteration_bounds = array<i64: 1>, scalar_prefetch = 0 : i64, scratch_operands = 0 : i64, tpu.core_type = #tpu.core_type<tc>, window_params = [{transform_indices = @transform_0, window_bounds = array<i64: 8, 2, 32>}, {transform_indices = @transform_1, window_bounds = array<i64: 2, 8>}, {pipeline_mode = #tpu.pipeline_mode<synchronous>, transform_indices = @transform_2, window_bounds = array<i64: 1, 32>}, {pipeline_mode = #tpu.pipeline_mode<synchronous>, transform_indices = @transform_3, window_bounds = array<i64: 1, 32>}, {pipeline_mode = #tpu.pipeline_mode<synchronous>, transform_indices = @transform_4, window_bounds = array<i64: 32, 96>}, {pipeline_mode = #tpu.pipeline_mode<synchronous>, transform_indices = @transform_5, window_bounds = array<i64: 1, 96>}, {pipeline_mode = #tpu.pipeline_mode<synchronous>, transform_indices = @transform_6, window_bounds = array<i64: 32, 32>}, {pipeline_mode = #tpu.pipeline_mode<synchronous>, transform_indices = @transform_7, window_bounds = array<i64: 1, 32>}, {pipeline_mode = #tpu.pipeline_mode<synchronous>, transform_indices = @transform_8, window_bounds = array<i64: 1, 32>}, {pipeline_mode = #tpu.pipeline_mode<synchronous>, transform_indices = @transform_9, window_bounds = array<i64: 1, 32>}, {pipeline_mode = #tpu.pipeline_mode<synchronous>, transform_indices = @transform_10, window_bounds = array<i64: 32, 64>}, {pipeline_mode = #tpu.pipeline_mode<synchronous>, transform_indices = @transform_11, window_bounds = array<i64: 1, 64>}, {pipeline_mode = #tpu.pipeline_mode<synchronous>, transform_indices = @transform_12, window_bounds = array<i64: 64, 32>}, {pipeline_mode = #tpu.pipeline_mode<synchronous>, transform_indices = @transform_13, window_bounds = array<i64: 1, 32>}, {transform_indices = @transform_14, window_bounds = array<i64: 8, 2, 32>}]} {
    %c0 = arith.constant 0 : index
    %c0_0 = arith.constant 0 : index
    %c0_1 = arith.constant 0 : index
    %0 = vector.load %arg1[%c0, %c0_0, %c0_1] : memref<8x2x32xf32, #tpu.memory_space<vmem>>, vector<8x2x32xf32>
    %1 = vector.extract_strided_slice %0 {offsets = [0, 0, 0], sizes = [8, 1, 32], strides = [1, 1, 1]} : vector<8x2x32xf32> to vector<8x1x32xf32>
    %2 = vector.shape_cast %1 : vector<8x1x32xf32> to vector<8x32xf32>
    %3 = vector.extract_strided_slice %0 {offsets = [0, 1, 0], sizes = [8, 1, 32], strides = [1, 1, 1]} : vector<8x2x32xf32> to vector<8x1x32xf32>
    %4 = vector.shape_cast %3 : vector<8x1x32xf32> to vector<8x32xf32>
    %5 = tpu.concatenate %2, %4 in 0 : vector<8x32xf32>, vector<8x32xf32> -> vector<16x32xf32>
    %c0_2 = arith.constant 0 : index
    %c0_3 = arith.constant 0 : index
    %6 = vector.load %arg3[%c0_2, %c0_3] : memref<1x32xf32, #tpu.memory_space<vmem>>, vector<1x32xf32>
    %c0_4 = arith.constant 0 : index
    %c0_5 = arith.constant 0 : index
    %7 = vector.load %arg4[%c0_4, %c0_5] : memref<1x32xf32, #tpu.memory_space<vmem>>, vector<1x32xf32>
    %cst = arith.constant dense<0.000000e+00> : vector<16xf32>
    %8 = vector.multi_reduction <add>, %5, %cst [1] : vector<16x32xf32> to vector<16xf32>
    %9 = vector.shape_cast %8 : vector<16xf32> to vector<16x1xf32>
    %cst_6 = arith.constant 3.125000e-02 : f32
    %10 = vector.broadcast %cst_6 : f32 to vector<16x1xf32>
    %11 = arith.mulf %9, %10 : vector<16x1xf32>
    %12 = vector.broadcast %11 : vector<16x1xf32> to vector<16x32xf32>
    %13 = arith.subf %5, %12 : vector<16x32xf32>
    %14 = arith.mulf %13, %13 : vector<16x32xf32>
    %cst_7 = arith.constant dense<0.000000e+00> : vector<16xf32>
    %15 = vector.multi_reduction <add>, %14, %cst_7 [1] : vector<16x32xf32> to vector<16xf32>
    %16 = vector.shape_cast %15 : vector<16xf32> to vector<16x1xf32>
    %cst_8 = arith.constant 3.125000e-02 : f32
    %17 = vector.broadcast %cst_8 : f32 to vector<16x1xf32>
    %18 = arith.mulf %16, %17 : vector<16x1xf32>
    %cst_9 = arith.constant 9.99999974E-6 : f32
    %19 = vector.broadcast %cst_9 : f32 to vector<16x1xf32>
    %20 = arith.addf %18, %19 : vector<16x1xf32>
    %21 = math.rsqrt %20 : vector<16x1xf32>
    %22 = vector.broadcast %21 : vector<16x1xf32> to vector<16x32xf32>
    %23 = arith.mulf %13, %22 : vector<16x32xf32>
    %24 = vector.broadcast %6 : vector<1x32xf32> to vector<16x32xf32>
    %25 = arith.mulf %23, %24 : vector<16x32xf32>
    %26 = vector.broadcast %7 : vector<1x32xf32> to vector<16x32xf32>
    %27 = arith.addf %25, %26 : vector<16x32xf32>
    %c0_10 = arith.constant 0 : index
    %c0_11 = arith.constant 0 : index
    %28 = vector.load %arg5[%c0_10, %c0_11] : memref<32x96xf32, #tpu.memory_space<vmem>>, vector<32x96xf32>
    %cst_12 = arith.constant dense<0.000000e+00> : vector<16x96xf32>
    %29 = tpu.matmul %27, %28, %cst_12 {dimension_numbers = #tpu.dot_dimension_numbers<[1], [0], [0], [1], [0, 0, 1, 1], [], []>} : vector<16x32xf32>, vector<32x96xf32>, vector<16x96xf32> -> vector<16x96xf32>
    %c0_13 = arith.constant 0 : index
    %c0_14 = arith.constant 0 : index
    %30 = vector.load %arg6[%c0_13, %c0_14] : memref<1x96xf32, #tpu.memory_space<vmem>>, vector<1x96xf32>
    %31 = vector.broadcast %30 : vector<1x96xf32> to vector<16x96xf32>
    %32 = arith.addf %29, %31 : vector<16x96xf32>
    %33 = vector.extract_strided_slice %32 {offsets = [0, 0], sizes = [16, 32], strides = [1, 1]} : vector<16x96xf32> to vector<16x32xf32>
    %cst_15 = arith.constant 0.176776692 : f32
    %34 = vector.broadcast %cst_15 : f32 to vector<16x32xf32>
    %35 = arith.mulf %33, %34 : vector<16x32xf32>
    %36 = vector.shape_cast %35 : vector<16x32xf32> to vector<2x8x32xf32>
    %37 = vector.extract_strided_slice %32 {offsets = [0, 32], sizes = [16, 32], strides = [1, 1]} : vector<16x96xf32> to vector<16x32xf32>
    %38 = vector.shape_cast %37 : vector<16x32xf32> to vector<2x8x32xf32>
    %39 = vector.extract_strided_slice %32 {offsets = [0, 64], sizes = [16, 32], strides = [1, 1]} : vector<16x96xf32> to vector<16x32xf32>
    %40 = vector.shape_cast %39 : vector<16x32xf32> to vector<2x8x32xf32>
    %c0_16 = arith.constant 0 : index
    %c0_17 = arith.constant 0 : index
    %41 = vector.load %arg2[%c0_16, %c0_17] : memref<2x8xf32, #tpu.memory_space<vmem>>, vector<2x8xf32>
    %cst_18 = arith.constant 5.000000e-01 : f32
    %42 = vector.broadcast %cst_18 : f32 to vector<2x8xf32>
    %43 = arith.cmpf ogt, %41, %42 : vector<2x8xf32>
    %44 = vector.shape_cast %43 : vector<2x8xi1> to vector<2x1x8xi1>
    %45 = vector.extract_strided_slice %36 {offsets = [0, 0, 0], sizes = [2, 8, 8], strides = [1, 1, 1]} : vector<2x8x32xf32> to vector<2x8x8xf32>
    %46 = vector.extract_strided_slice %38 {offsets = [0, 0, 0], sizes = [2, 8, 8], strides = [1, 1, 1]} : vector<2x8x32xf32> to vector<2x8x8xf32>
    %47 = vector.extract_strided_slice %40 {offsets = [0, 0, 0], sizes = [2, 8, 8], strides = [1, 1, 1]} : vector<2x8x32xf32> to vector<2x8x8xf32>
    "tpu.trace_start"() <{level = 10 : i32, message = "bmd,bnd->bmn"}> : () -> ()
    %cst_19 = arith.constant dense<0.000000e+00> : vector<2x8x8xf32>
    %48 = tpu.matmul %45, %46, %cst_19 {dimension_numbers = #tpu.dot_dimension_numbers<[2], [2], [1], [1], [0, 0, 0, 1, 1, 1], [0], [0]>} : vector<2x8x8xf32>, vector<2x8x8xf32>, vector<2x8x8xf32> -> vector<2x8x8xf32>
    %cst_20 = arith.constant -1.000000e+05 : f32
    "tpu.trace_stop"() : () -> ()
    %49 = vector.shape_cast %44 : vector<2x1x8xi1> to vector<2x1x8xi1>
    %50 = vector.broadcast %49 : vector<2x1x8xi1> to vector<2x8x8xi1>
    %51 = vector.broadcast %cst_20 : f32 to vector<2x8x8xf32>
    %52 = arith.select %50, %51, %48 : vector<2x8x8xi1>, vector<2x8x8xf32>
    %cst_21 = arith.constant dense<0xFF800000> : vector<2x8xf32>
    %53 = vector.multi_reduction <maximumf>, %52, %cst_21 [2] : vector<2x8x8xf32> to vector<2x8xf32>
    %54 = vector.shape_cast %53 : vector<2x8xf32> to vector<2x8x1xf32>
    %55 = vector.broadcast %54 : vector<2x8x1xf32> to vector<2x8x8xf32>
    %56 = arith.subf %52, %55 : vector<2x8x8xf32>
    %57 = math.exp %56 : vector<2x8x8xf32>
    %cst_22 = arith.constant dense<0.000000e+00> : vector<2x8xf32>
    %58 = vector.multi_reduction <add>, %57, %cst_22 [2] : vector<2x8x8xf32> to vector<2x8xf32>
    %59 = vector.shape_cast %58 : vector<2x8xf32> to vector<2x8x1xf32>
    %60 = vector.broadcast %59 : vector<2x8x1xf32> to vector<2x8x8xf32>
    %61 = arith.divf %57, %60 : vector<2x8x8xf32>
    "tpu.trace_start"() <{level = 10 : i32, message = "bmn,bnd->bmd"}> : () -> ()
    %cst_23 = arith.constant dense<0.000000e+00> : vector<2x8x8xf32>
    %62 = tpu.matmul %61, %47, %cst_23 {dimension_numbers = #tpu.dot_dimension_numbers<[2], [1], [1], [2], [0, 0, 0, 1, 1, 2], [0], [0]>} : vector<2x8x8xf32>, vector<2x8x8xf32>, vector<2x8x8xf32> -> vector<2x8x8xf32>
    "tpu.trace_stop"() : () -> ()
    %63 = vector.shape_cast %62 : vector<2x8x8xf32> to vector<16x8xf32>
    %64 = vector.extract_strided_slice %36 {offsets = [0, 0, 8], sizes = [2, 8, 8], strides = [1, 1, 1]} : vector<2x8x32xf32> to vector<2x8x8xf32>
    %65 = vector.extract_strided_slice %38 {offsets = [0, 0, 8], sizes = [2, 8, 8], strides = [1, 1, 1]} : vector<2x8x32xf32> to vector<2x8x8xf32>
    %66 = vector.extract_strided_slice %40 {offsets = [0, 0, 8], sizes = [2, 8, 8], strides = [1, 1, 1]} : vector<2x8x32xf32> to vector<2x8x8xf32>
    "tpu.trace_start"() <{level = 10 : i32, message = "bmd,bnd->bmn"}> : () -> ()
    %cst_24 = arith.constant dense<0.000000e+00> : vector<2x8x8xf32>
    %67 = tpu.matmul %64, %65, %cst_24 {dimension_numbers = #tpu.dot_dimension_numbers<[2], [2], [1], [1], [0, 0, 0, 1, 1, 1], [0], [0]>} : vector<2x8x8xf32>, vector<2x8x8xf32>, vector<2x8x8xf32> -> vector<2x8x8xf32>
    %cst_25 = arith.constant -1.000000e+05 : f32
    "tpu.trace_stop"() : () -> ()
    %68 = vector.shape_cast %44 : vector<2x1x8xi1> to vector<2x1x8xi1>
    %69 = vector.broadcast %68 : vector<2x1x8xi1> to vector<2x8x8xi1>
    %70 = vector.broadcast %cst_25 : f32 to vector<2x8x8xf32>
    %71 = arith.select %69, %70, %67 : vector<2x8x8xi1>, vector<2x8x8xf32>
    %cst_26 = arith.constant dense<0xFF800000> : vector<2x8xf32>
    %72 = vector.multi_reduction <maximumf>, %71, %cst_26 [2] : vector<2x8x8xf32> to vector<2x8xf32>
    %73 = vector.shape_cast %72 : vector<2x8xf32> to vector<2x8x1xf32>
    %74 = vector.broadcast %73 : vector<2x8x1xf32> to vector<2x8x8xf32>
    %75 = arith.subf %71, %74 : vector<2x8x8xf32>
    %76 = math.exp %75 : vector<2x8x8xf32>
    %cst_27 = arith.constant dense<0.000000e+00> : vector<2x8xf32>
    %77 = vector.multi_reduction <add>, %76, %cst_27 [2] : vector<2x8x8xf32> to vector<2x8xf32>
    %78 = vector.shape_cast %77 : vector<2x8xf32> to vector<2x8x1xf32>
    %79 = vector.broadcast %78 : vector<2x8x1xf32> to vector<2x8x8xf32>
    %80 = arith.divf %76, %79 : vector<2x8x8xf32>
    "tpu.trace_start"() <{level = 10 : i32, message = "bmn,bnd->bmd"}> : () -> ()
    %cst_28 = arith.constant dense<0.000000e+00> : vector<2x8x8xf32>
    %81 = tpu.matmul %80, %66, %cst_28 {dimension_numbers = #tpu.dot_dimension_numbers<[2], [1], [1], [2], [0, 0, 0, 1, 1, 2], [0], [0]>} : vector<2x8x8xf32>, vector<2x8x8xf32>, vector<2x8x8xf32> -> vector<2x8x8xf32>
    "tpu.trace_stop"() : () -> ()
    %82 = vector.shape_cast %81 : vector<2x8x8xf32> to vector<16x8xf32>
    %83 = vector.extract_strided_slice %36 {offsets = [0, 0, 16], sizes = [2, 8, 8], strides = [1, 1, 1]} : vector<2x8x32xf32> to vector<2x8x8xf32>
    %84 = vector.extract_strided_slice %38 {offsets = [0, 0, 16], sizes = [2, 8, 8], strides = [1, 1, 1]} : vector<2x8x32xf32> to vector<2x8x8xf32>
    %85 = vector.extract_strided_slice %40 {offsets = [0, 0, 16], sizes = [2, 8, 8], strides = [1, 1, 1]} : vector<2x8x32xf32> to vector<2x8x8xf32>
    "tpu.trace_start"() <{level = 10 : i32, message = "bmd,bnd->bmn"}> : () -> ()
    %cst_29 = arith.constant dense<0.000000e+00> : vector<2x8x8xf32>
    %86 = tpu.matmul %83, %84, %cst_29 {dimension_numbers = #tpu.dot_dimension_numbers<[2], [2], [1], [1], [0, 0, 0, 1, 1, 1], [0], [0]>} : vector<2x8x8xf32>, vector<2x8x8xf32>, vector<2x8x8xf32> -> vector<2x8x8xf32>
    %cst_30 = arith.constant -1.000000e+05 : f32
    "tpu.trace_stop"() : () -> ()
    %87 = vector.shape_cast %44 : vector<2x1x8xi1> to vector<2x1x8xi1>
    %88 = vector.broadcast %87 : vector<2x1x8xi1> to vector<2x8x8xi1>
    %89 = vector.broadcast %cst_30 : f32 to vector<2x8x8xf32>
    %90 = arith.select %88, %89, %86 : vector<2x8x8xi1>, vector<2x8x8xf32>
    %cst_31 = arith.constant dense<0xFF800000> : vector<2x8xf32>
    %91 = vector.multi_reduction <maximumf>, %90, %cst_31 [2] : vector<2x8x8xf32> to vector<2x8xf32>
    %92 = vector.shape_cast %91 : vector<2x8xf32> to vector<2x8x1xf32>
    %93 = vector.broadcast %92 : vector<2x8x1xf32> to vector<2x8x8xf32>
    %94 = arith.subf %90, %93 : vector<2x8x8xf32>
    %95 = math.exp %94 : vector<2x8x8xf32>
    %cst_32 = arith.constant dense<0.000000e+00> : vector<2x8xf32>
    %96 = vector.multi_reduction <add>, %95, %cst_32 [2] : vector<2x8x8xf32> to vector<2x8xf32>
    %97 = vector.shape_cast %96 : vector<2x8xf32> to vector<2x8x1xf32>
    %98 = vector.broadcast %97 : vector<2x8x1xf32> to vector<2x8x8xf32>
    %99 = arith.divf %95, %98 : vector<2x8x8xf32>
    "tpu.trace_start"() <{level = 10 : i32, message = "bmn,bnd->bmd"}> : () -> ()
    %cst_33 = arith.constant dense<0.000000e+00> : vector<2x8x8xf32>
    %100 = tpu.matmul %99, %85, %cst_33 {dimension_numbers = #tpu.dot_dimension_numbers<[2], [1], [1], [2], [0, 0, 0, 1, 1, 2], [0], [0]>} : vector<2x8x8xf32>, vector<2x8x8xf32>, vector<2x8x8xf32> -> vector<2x8x8xf32>
    "tpu.trace_stop"() : () -> ()
    %101 = vector.shape_cast %100 : vector<2x8x8xf32> to vector<16x8xf32>
    %102 = vector.extract_strided_slice %36 {offsets = [0, 0, 24], sizes = [2, 8, 8], strides = [1, 1, 1]} : vector<2x8x32xf32> to vector<2x8x8xf32>
    %103 = vector.extract_strided_slice %38 {offsets = [0, 0, 24], sizes = [2, 8, 8], strides = [1, 1, 1]} : vector<2x8x32xf32> to vector<2x8x8xf32>
    %104 = vector.extract_strided_slice %40 {offsets = [0, 0, 24], sizes = [2, 8, 8], strides = [1, 1, 1]} : vector<2x8x32xf32> to vector<2x8x8xf32>
    "tpu.trace_start"() <{level = 10 : i32, message = "bmd,bnd->bmn"}> : () -> ()
    %cst_34 = arith.constant dense<0.000000e+00> : vector<2x8x8xf32>
    %105 = tpu.matmul %102, %103, %cst_34 {dimension_numbers = #tpu.dot_dimension_numbers<[2], [2], [1], [1], [0, 0, 0, 1, 1, 1], [0], [0]>} : vector<2x8x8xf32>, vector<2x8x8xf32>, vector<2x8x8xf32> -> vector<2x8x8xf32>
    %cst_35 = arith.constant -1.000000e+05 : f32
    "tpu.trace_stop"() : () -> ()
    %106 = vector.shape_cast %44 : vector<2x1x8xi1> to vector<2x1x8xi1>
    %107 = vector.broadcast %106 : vector<2x1x8xi1> to vector<2x8x8xi1>
    %108 = vector.broadcast %cst_35 : f32 to vector<2x8x8xf32>
    %109 = arith.select %107, %108, %105 : vector<2x8x8xi1>, vector<2x8x8xf32>
    %cst_36 = arith.constant dense<0xFF800000> : vector<2x8xf32>
    %110 = vector.multi_reduction <maximumf>, %109, %cst_36 [2] : vector<2x8x8xf32> to vector<2x8xf32>
    %111 = vector.shape_cast %110 : vector<2x8xf32> to vector<2x8x1xf32>
    %112 = vector.broadcast %111 : vector<2x8x1xf32> to vector<2x8x8xf32>
    %113 = arith.subf %109, %112 : vector<2x8x8xf32>
    %114 = math.exp %113 : vector<2x8x8xf32>
    %cst_37 = arith.constant dense<0.000000e+00> : vector<2x8xf32>
    %115 = vector.multi_reduction <add>, %114, %cst_37 [2] : vector<2x8x8xf32> to vector<2x8xf32>
    %116 = vector.shape_cast %115 : vector<2x8xf32> to vector<2x8x1xf32>
    %117 = vector.broadcast %116 : vector<2x8x1xf32> to vector<2x8x8xf32>
    %118 = arith.divf %114, %117 : vector<2x8x8xf32>
    "tpu.trace_start"() <{level = 10 : i32, message = "bmn,bnd->bmd"}> : () -> ()
    %cst_38 = arith.constant dense<0.000000e+00> : vector<2x8x8xf32>
    %119 = tpu.matmul %118, %104, %cst_38 {dimension_numbers = #tpu.dot_dimension_numbers<[2], [1], [1], [2], [0, 0, 0, 1, 1, 2], [0], [0]>} : vector<2x8x8xf32>, vector<2x8x8xf32>, vector<2x8x8xf32> -> vector<2x8x8xf32>
    "tpu.trace_stop"() : () -> ()
    %120 = vector.shape_cast %119 : vector<2x8x8xf32> to vector<16x8xf32>
    %121 = tpu.concatenate %63, %82, %101, %120 in 1 : vector<16x8xf32>, vector<16x8xf32>, vector<16x8xf32>, vector<16x8xf32> -> vector<16x32xf32>
    %c0_39 = arith.constant 0 : index
    %c0_40 = arith.constant 0 : index
    %122 = vector.load %arg7[%c0_39, %c0_40] : memref<32x32xf32, #tpu.memory_space<vmem>>, vector<32x32xf32>
    %cst_41 = arith.constant dense<0.000000e+00> : vector<16x32xf32>
    %123 = tpu.matmul %121, %122, %cst_41 {dimension_numbers = #tpu.dot_dimension_numbers<[1], [0], [0], [1], [0, 0, 1, 1], [], []>} : vector<16x32xf32>, vector<32x32xf32>, vector<16x32xf32> -> vector<16x32xf32>
    %c0_42 = arith.constant 0 : index
    %c0_43 = arith.constant 0 : index
    %124 = vector.load %arg8[%c0_42, %c0_43] : memref<1x32xf32, #tpu.memory_space<vmem>>, vector<1x32xf32>
    %125 = vector.broadcast %124 : vector<1x32xf32> to vector<16x32xf32>
    %126 = arith.addf %123, %125 : vector<16x32xf32>
    %127 = arith.addf %5, %126 : vector<16x32xf32>
    %c0_44 = arith.constant 0 : index
    %c0_45 = arith.constant 0 : index
    %128 = vector.load %arg9[%c0_44, %c0_45] : memref<1x32xf32, #tpu.memory_space<vmem>>, vector<1x32xf32>
    %c0_46 = arith.constant 0 : index
    %c0_47 = arith.constant 0 : index
    %129 = vector.load %arg10[%c0_46, %c0_47] : memref<1x32xf32, #tpu.memory_space<vmem>>, vector<1x32xf32>
    %cst_48 = arith.constant dense<0.000000e+00> : vector<16xf32>
    %130 = vector.multi_reduction <add>, %127, %cst_48 [1] : vector<16x32xf32> to vector<16xf32>
    %131 = vector.shape_cast %130 : vector<16xf32> to vector<16x1xf32>
    %cst_49 = arith.constant 3.125000e-02 : f32
    %132 = vector.broadcast %cst_49 : f32 to vector<16x1xf32>
    %133 = arith.mulf %131, %132 : vector<16x1xf32>
    %134 = vector.broadcast %133 : vector<16x1xf32> to vector<16x32xf32>
    %135 = arith.subf %127, %134 : vector<16x32xf32>
    %136 = arith.mulf %135, %135 : vector<16x32xf32>
    %cst_50 = arith.constant dense<0.000000e+00> : vector<16xf32>
    %137 = vector.multi_reduction <add>, %136, %cst_50 [1] : vector<16x32xf32> to vector<16xf32>
    %138 = vector.shape_cast %137 : vector<16xf32> to vector<16x1xf32>
    %cst_51 = arith.constant 3.125000e-02 : f32
    %139 = vector.broadcast %cst_51 : f32 to vector<16x1xf32>
    %140 = arith.mulf %138, %139 : vector<16x1xf32>
    %cst_52 = arith.constant 9.99999974E-6 : f32
    %141 = vector.broadcast %cst_52 : f32 to vector<16x1xf32>
    %142 = arith.addf %140, %141 : vector<16x1xf32>
    %143 = math.rsqrt %142 : vector<16x1xf32>
    %144 = vector.broadcast %143 : vector<16x1xf32> to vector<16x32xf32>
    %145 = arith.mulf %135, %144 : vector<16x32xf32>
    %146 = vector.broadcast %128 : vector<1x32xf32> to vector<16x32xf32>
    %147 = arith.mulf %145, %146 : vector<16x32xf32>
    %148 = vector.broadcast %129 : vector<1x32xf32> to vector<16x32xf32>
    %149 = arith.addf %147, %148 : vector<16x32xf32>
    %c0_53 = arith.constant 0 : index
    %c0_54 = arith.constant 0 : index
    %150 = vector.load %arg11[%c0_53, %c0_54] : memref<32x64xf32, #tpu.memory_space<vmem>>, vector<32x64xf32>
    %cst_55 = arith.constant dense<0.000000e+00> : vector<16x64xf32>
    %151 = tpu.matmul %149, %150, %cst_55 {dimension_numbers = #tpu.dot_dimension_numbers<[1], [0], [0], [1], [0, 0, 1, 1], [], []>} : vector<16x32xf32>, vector<32x64xf32>, vector<16x64xf32> -> vector<16x64xf32>
    %c0_56 = arith.constant 0 : index
    %c0_57 = arith.constant 0 : index
    %152 = vector.load %arg12[%c0_56, %c0_57] : memref<1x64xf32, #tpu.memory_space<vmem>>, vector<1x64xf32>
    %153 = vector.broadcast %152 : vector<1x64xf32> to vector<16x64xf32>
    %154 = arith.addf %151, %153 : vector<16x64xf32>
    %cst_58 = arith.constant 0.000000e+00 : f32
    %155 = vector.broadcast %cst_58 : f32 to vector<16x64xf32>
    %156 = arith.maximumf %154, %155 : vector<16x64xf32>
    %c0_59 = arith.constant 0 : index
    %c0_60 = arith.constant 0 : index
    %157 = vector.load %arg13[%c0_59, %c0_60] : memref<64x32xf32, #tpu.memory_space<vmem>>, vector<64x32xf32>
    %cst_61 = arith.constant dense<0.000000e+00> : vector<16x32xf32>
    %158 = tpu.matmul %156, %157, %cst_61 {dimension_numbers = #tpu.dot_dimension_numbers<[1], [0], [0], [1], [0, 0, 1, 1], [], []>} : vector<16x64xf32>, vector<64x32xf32>, vector<16x32xf32> -> vector<16x32xf32>
    %c0_62 = arith.constant 0 : index
    %c0_63 = arith.constant 0 : index
    %159 = vector.load %arg14[%c0_62, %c0_63] : memref<1x32xf32, #tpu.memory_space<vmem>>, vector<1x32xf32>
    %160 = vector.broadcast %159 : vector<1x32xf32> to vector<16x32xf32>
    %161 = arith.addf %158, %160 : vector<16x32xf32>
    %162 = arith.addf %127, %161 : vector<16x32xf32>
    %163 = vector.extract_strided_slice %162 {offsets = [0, 0], sizes = [8, 32], strides = [1, 1]} : vector<16x32xf32> to vector<8x32xf32>
    %164 = vector.extract_strided_slice %162 {offsets = [8, 0], sizes = [8, 32], strides = [1, 1]} : vector<16x32xf32> to vector<8x32xf32>
    %165 = vector.shape_cast %163 : vector<8x32xf32> to vector<8x1x32xf32>
    %166 = vector.shape_cast %164 : vector<8x32xf32> to vector<8x1x32xf32>
    %167 = tpu.concatenate %165, %166 in 1 : vector<8x1x32xf32>, vector<8x1x32xf32> -> vector<8x2x32xf32>
    %c0_64 = arith.constant 0 : index
    %c0_65 = arith.constant 0 : index
    %c0_66 = arith.constant 0 : index
    %168 = vector.load %arg15[%c0_64, %c0_65, %c0_66] : memref<8x2x32xf32, #tpu.memory_space<vmem>>, vector<8x2x32xf32>
    tpu.vector_store %arg15[%c0_64, %c0_65, %c0_66], %167 {strides = array<i32>} : memref<8x2x32xf32, #tpu.memory_space<vmem>>, vector<8x2x32xf32>,
    return
  }
  func.func @transform_0(%arg0: i32) -> (i32, i32, i32) {
    %c0_i32 = arith.constant 0 : i32
    %c0_i32_0 = arith.constant 0 : i32
    %c0_i32_1 = arith.constant 0 : i32
    return %c0_i32, %arg0, %c0_i32_0 : i32, i32, i32
  }
  func.func @transform_1(%arg0: i32) -> (i32, i32) {
    %c0_i32 = arith.constant 0 : i32
    %c0_i32_0 = arith.constant 0 : i32
    return %arg0, %c0_i32 : i32, i32
  }
  func.func @transform_2(%arg0: i32) -> (i32, i32) {
    %c0_i32 = arith.constant 0 : i32
    %c0_i32_0 = arith.constant 0 : i32
    %c0_i32_1 = arith.constant 0 : i32
    return %c0_i32, %c0_i32_0 : i32, i32
  }
  func.func @transform_3(%arg0: i32) -> (i32, i32) {
    %c0_i32 = arith.constant 0 : i32
    %c0_i32_0 = arith.constant 0 : i32
    %c0_i32_1 = arith.constant 0 : i32
    return %c0_i32, %c0_i32_0 : i32, i32
  }
  func.func @transform_4(%arg0: i32) -> (i32, i32) {
    %c0_i32 = arith.constant 0 : i32
    %c0_i32_0 = arith.constant 0 : i32
    %c0_i32_1 = arith.constant 0 : i32
    return %c0_i32, %c0_i32_0 : i32, i32
  }
  func.func @transform_5(%arg0: i32) -> (i32, i32) {
    %c0_i32 = arith.constant 0 : i32
    %c0_i32_0 = arith.constant 0 : i32
    %c0_i32_1 = arith.constant 0 : i32
    return %c0_i32, %c0_i32_0 : i32, i32
  }
  func.func @transform_6(%arg0: i32) -> (i32, i32) {
    %c0_i32 = arith.constant 0 : i32
    %c0_i32_0 = arith.constant 0 : i32
    %c0_i32_1 = arith.constant 0 : i32
    return %c0_i32, %c0_i32_0 : i32, i32
  }
  func.func @transform_7(%arg0: i32) -> (i32, i32) {
    %c0_i32 = arith.constant 0 : i32
    %c0_i32_0 = arith.constant 0 : i32
    %c0_i32_1 = arith.constant 0 : i32
    return %c0_i32, %c0_i32_0 : i32, i32
  }
  func.func @transform_8(%arg0: i32) -> (i32, i32) {
    %c0_i32 = arith.constant 0 : i32
    %c0_i32_0 = arith.constant 0 : i32
    %c0_i32_1 = arith.constant 0 : i32
    return %c0_i32, %c0_i32_0 : i32, i32
  }
  func.func @transform_9(%arg0: i32) -> (i32, i32) {
    %c0_i32 = arith.constant 0 : i32
    %c0_i32_0 = arith.constant 0 : i32
    %c0_i32_1 = arith.constant 0 : i32
    return %c0_i32, %c0_i32_0 : i32, i32
  }
  func.func @transform_10(%arg0: i32) -> (i32, i32) {
    %c0_i32 = arith.constant 0 : i32
    %c0_i32_0 = arith.constant 0 : i32
    %c0_i32_1 = arith.constant 0 : i32
    return %c0_i32, %c0_i32_0 : i32, i32
  }
  func.func @transform_11(%arg0: i32) -> (i32, i32) {
    %c0_i32 = arith.constant 0 : i32
    %c0_i32_0 = arith.constant 0 : i32
    %c0_i32_1 = arith.constant 0 : i32
    return %c0_i32, %c0_i32_0 : i32, i32
  }
  func.func @transform_12(%arg0: i32) -> (i32, i32) {
    %c0_i32 = arith.constant 0 : i32
    %c0_i32_0 = arith.constant 0 : i32
    %c0_i32_1 = arith.constant 0 : i32
    return %c0_i32, %c0_i32_0 : i32, i32
  }
  func.func @transform_13(%arg0: i32) -> (i32, i32) {
    %c0_i32 = arith.constant 0 : i32
    %c0_i32_0 = arith.constant 0 : i32
    %c0_i32_1 = arith.constant 0 : i32
    return %c0_i32, %c0_i32_0 : i32, i32
  }
  func.func @transform_14(%arg0: i32) -> (i32, i32, i32) {
    %c0_i32 = arith.constant 0 : i32
    %c0_i32_0 = arith.constant 0 : i32
    %c0_i32_1 = arith.constant 0 : i32
    return %c0_i32, %arg0, %c0_i32_0 : i32, i32, i32
  }
}

</mosaic_0001>

<llo_original>
// kernel: tpu_custom_call.1
$region0: #{tpu_custom_call.1}
  #allocation0 [shape = 'u32[]', space=smem, size = 0x4, offset = 0x4, fixed_abs, tag = 'smem constant byte address 0x4 - core index']
  #allocation1 [shape = 'u32[144,128]{1,0:T(1,128)}', space=vmem, size = 0x12000, scoped, tag = 'internal scratch']
  %s0 = inlined_call_operand.hbm [shape: f32[8,2,32], index: 0, kind: input, shape index: {}]
  %s1 = inlined_call_operand.hbm [shape: f32[2,8], index: 1, kind: input, shape index: {}]
  %s2 = inlined_call_operand.vmem [shape: f32[1,32], index: 2, kind: input, shape index: {}]
  %s3 = inlined_call_operand.vmem [shape: f32[1,32], index: 3, kind: input, shape index: {}]
  %s4 = inlined_call_operand.vmem [shape: f32[32,96], index: 4, kind: input, shape index: {}]
  %s5 = inlined_call_operand.vmem [shape: f32[1,96], index: 5, kind: input, shape index: {}]
  %s6 = inlined_call_operand.vmem [shape: f32[32,32], index: 6, kind: input, shape index: {}]
  %s7 = inlined_call_operand.vmem [shape: f32[1,32], index: 7, kind: input, shape index: {}]
  %s8 = inlined_call_operand.vmem [shape: f32[1,32], index: 8, kind: input, shape index: {}]
  %s9 = inlined_call_operand.vmem [shape: f32[1,32], index: 9, kind: input, shape index: {}]
  %s10 = inlined_call_operand.vmem [shape: f32[32,64], index: 10, kind: input, shape index: {}]
  %s11 = inlined_call_operand.vmem [shape: f32[1,64], index: 11, kind: input, shape index: {}]
  %s12 = inlined_call_operand.vmem [shape: f32[64,32], index: 12, kind: input, shape index: {}]
  %s13 = inlined_call_operand.vmem [shape: f32[1,32], index: 13, kind: input, shape index: {}]
  %s14 = inlined_call_operand.hbm [shape: f32[8,2,32], index: 14, kind: output, shape index: {}]
  %s15 = sld [smem:[#allocation0]]
  $region74: #{tpu_custom_call.1} parent=0
    _
  %s17 = ssub.s32 1, %s15
  %s18 = scalar_select 0, %s17, %s15
  $region1: #{tpu_custom_call.1} parent=0
    #allocation2 [shape = 'u8[8192]{0}', space=vmem, size = 0x2000, scoped, tag = 'input window, operand 0, single buffered']
    #allocation3 [shape = 's32[1]{0}', space=sflag, size = 0x4, scoped, tag = 'scoped memory for tpu_custom_call.1']
    #allocation4 [shape = 's32[1]{0}', space=sflag, size = 0x4, scoped, tag = 'scoped memory for tpu_custom_call.1']
    #allocation5 [shape = 'u8[1024]{0}', space=vmem, size = 0x400, scoped, tag = 'input window, operand 1, single buffered']
    #allocation6 [shape = 's32[1]{0}', space=sflag, size = 0x4, scoped, tag = 'scoped memory for tpu_custom_call.1']
    #allocation7 [shape = 'u8[8192]{0}', space=vmem, size = 0x2000, scoped, tag = 'output window, operand 0, single buffered']
    %19 = vsyncpa [#allocation3], 0
    %20 = vsyncpa [#allocation6], 0
    %21 = vsyncpa [#allocation4], 0
    // Predicated region
    $region2: #{tpu_custom_call.1} parent=1 // pred_check
      _
    $region3: #{tpu_custom_call.1} parent=1 // pred_check_branch
      %23 = sbr.rel (0) target = $region5
    $region4: #{tpu_custom_call.1} parent=1 // pred_region
      %s25 = ssub.s32 256, 256
      %26 = vsyncadd [#allocation3], %s25
      %s27 = sshll.u32 [#allocation2], 4
      %s28 = int_to_ptr.vmem [resolvable:$true] %s27
      %33 = dma.hbm_to_vmem [thread:$0]  %s0, 256, %s28, [#allocation3], 32, 32, 2
    $region5: #{tpu_custom_call.1} parent=1 // pred_fallthru
      _
    // Predicated region
    $region6: #{tpu_custom_call.1} parent=1 // pred_check
      _
    $region7: #{tpu_custom_call.1} parent=1 // pred_check_branch
      %35 = sbr.rel (0) target = $region9
    $region8: #{tpu_custom_call.1} parent=1 // pred_region
      %s37 = ssub.s32 32, 32
      %38 = vsyncadd [#allocation6], %s37
      %s40 = sshll.u32 [#allocation5], 4
      %s41 = int_to_ptr.vmem [resolvable:$true] %s40
      %43 = dma.hbm_to_vmem [thread:$0]  %s1, 32, %s41, [#allocation6]
    $region9: #{tpu_custom_call.1} parent=1 // pred_fallthru
      _
    // Predicated region
    $region10: #{tpu_custom_call.1} parent=1 // pred_check
      _
    $region11: #{tpu_custom_call.1} parent=1 // pred_check_branch
      %45 = sbr.rel (0) target = $region13
    $region12: #{tpu_custom_call.1} parent=1 // pred_region
      _
    $region13: #{tpu_custom_call.1} parent=1 // pred_fallthru
      _
    // Predicated region
    $region14: #{tpu_custom_call.1} parent=1 // pred_check
      _
    $region15: #{tpu_custom_call.1} parent=1 // pred_check_branch
      %47 = sbr.rel (0) target = $region17
    $region16: #{tpu_custom_call.1} parent=1 // pred_region
      _
    $region17: #{tpu_custom_call.1} parent=1 // pred_fallthru
      _
    // Predicated region
    $region18: #{tpu_custom_call.1} parent=1 // pred_check
      _
    $region19: #{tpu_custom_call.1} parent=1 // pred_check_branch
      %49 = sbr.rel (0) target = $region21
    $region20: #{tpu_custom_call.1} parent=1 // pred_region
      _
    $region21: #{tpu_custom_call.1} parent=1 // pred_fallthru
      _
    // Predicated region
    $region22: #{tpu_custom_call.1} parent=1 // pred_check
      _
    $region23: #{tpu_custom_call.1} parent=1 // pred_check_branch
      %51 = sbr.rel (0) target = $region25
    $region24: #{tpu_custom_call.1} parent=1 // pred_region
      _
    $region25: #{tpu_custom_call.1} parent=1 // pred_fallthru
      _
    // Predicated region
    $region26: #{tpu_custom_call.1} parent=1 // pred_check
      _
    $region27: #{tpu_custom_call.1} parent=1 // pred_check_branch
      %53 = sbr.rel (0) target = $region29
    $region28: #{tpu_custom_call.1} parent=1 // pred_region
      _
    $region29: #{tpu_custom_call.1} parent=1 // pred_fallthru
      _
    // Predicated region
    $region30: #{tpu_custom_call.1} parent=1 // pred_check
      _
    $region31: #{tpu_custom_call.1} parent=1 // pred_check_branch
      %55 = sbr.rel (0) target = $region33
    $region32: #{tpu_custom_call.1} parent=1 // pred_region
      _
    $region33: #{tpu_custom_call.1} parent=1 // pred_fallthru
      _
    // Predicated region
    $region34: #{tpu_custom_call.1} parent=1 // pred_check
      _
    $region35: #{tpu_custom_call.1} parent=1 // pred_check_branch
      %57 = sbr.rel (0) target = $region37
    $region36: #{tpu_custom_call.1} parent=1 // pred_region
      _
    $region37: #{tpu_custom_call.1} parent=1 // pred_fallthru
      _
    // Predicated region
    $region38: #{tpu_custom_call.1} parent=1 // pred_check
      _
    $region39: #{tpu_custom_call.1} parent=1 // pred_check_branch
      %59 = sbr.rel (0) target = $region41
    $region40: #{tpu_custom_call.1} parent=1 // pred_region
      _
    $region41: #{tpu_custom_call.1} parent=1 // pred_fallthru
      _
    // Predicated region
    $region42: #{tpu_custom_call.1} parent=1 // pred_check
      _
    $region43: #{tpu_custom_call.1} parent=1 // pred_check_branch
      %61 = sbr.rel (0) target = $region45
    $region44: #{tpu_custom_call.1} parent=1 // pred_region
      _
    $region45: #{tpu_custom_call.1} parent=1 // pred_fallthru
      _
    // Predicated region
    $region46: #{tpu_custom_call.1} parent=1 // pred_check
      _
    $region47: #{tpu_custom_call.1} parent=1 // pred_check_branch
      %63 = sbr.rel (0) target = $region49
    $region48: #{tpu_custom_call.1} parent=1 // pred_region
      _
    $region49: #{tpu_custom_call.1} parent=1 // pred_fallthru
      _
    // Predicated region
    $region50: #{tpu_custom_call.1} parent=1 // pred_check
      _
    $region51: #{tpu_custom_call.1} parent=1 // pred_check_branch
      %65 = sbr.rel (0) target = $region53
    $region52: #{tpu_custom_call.1} parent=1 // pred_region
      _
    $region53: #{tpu_custom_call.1} parent=1 // pred_fallthru
      _
    // Predicated region
    $region54: #{tpu_custom_call.1} parent=1 // pred_check
      _
    $region55: #{tpu_custom_call.1} parent=1 // pred_check_branch
      %67 = sbr.rel (0) target = $region57
    $region56: #{tpu_custom_call.1} parent=1 // pred_region
      _
    $region57: #{tpu_custom_call.1} parent=1 // pred_fallthru
      _
    // Predicated region
    $region58: #{tpu_custom_call.1} parent=1 // pred_check
      _
    $region59: #{tpu_custom_call.1} parent=1 // pred_check_branch
      %69 = sbr.rel (0) target = $region61
    $region60: #{tpu_custom_call.1} parent=1 // pred_region
      %70 = dma.done [#allocation3], 256
    $region61: #{tpu_custom_call.1} parent=1 // pred_fallthru
      _
    // Predicated region
    $region62: #{tpu_custom_call.1} parent=1 // pred_check
      _
    $region63: #{tpu_custom_call.1} parent=1 // pred_check_branch
      %72 = sbr.rel (0) target = $region65
    $region64: #{tpu_custom_call.1} parent=1 // pred_region
      %73 = dma.done [#allocation6], 32
    $region65: #{tpu_custom_call.1} parent=1 // pred_fallthru
      _
    %v74 = vld [vmem:[#allocation2] sm:$0x3]
    %v75 = vld [vmem:[#allocation2 + $0x2] sm:$0x3]
    %v76 = vld [vmem:[#allocation2 + $0x4] sm:$0x3]
    %v77 = vld [vmem:[#allocation2 + $0x6] sm:$0x3]
    %v78 = vld [vmem:[#allocation2 + $0x8] sm:$0x3]
    %v79 = vld [vmem:[#allocation2 + $0xa] sm:$0x3]
    %v80 = vld [vmem:[#allocation2 + $0xc] sm:$0x3]
    %v81 = vld [vmem:[#allocation2 + $0xe] sm:$0x3]
    %v90 = vrot.slane %v75, 7
    %vm91 = vcmask 1041409
    %v92 = vsel %vm91, %v90, %v74
    %v93 = vrot.slane %v76, 6
    %vm94 = vcmask 1042434
    %v95 = vsel %vm94, %v93, %v92
    %v96 = vrot.slane %v77, 5
    %vm97 = vcmask 1043459
    %v98 = vsel %vm97, %v96, %v95
    %v99 = vrot.slane %v78, 4
    %vm100 = vcmask 1044484
    %v101 = vsel %vm100, %v99, %v98
    %v102 = vrot.slane %v79, 3
    %vm103 = vcmask 1045509
    %v104 = vsel %vm103, %v102, %v101
    %v105 = vrot.slane %v80, 2
    %vm106 = vcmask 1046534
    %v107 = vsel %vm106, %v105, %v104
    %v108 = vrot.slane %v81, 1
    %vm109 = vcmask 1047559
    %v110 = vsel %vm109, %v108, %v107
    %v112 = vrot.slane %v74, 1
    %v113 = vsel %vm91, %v75, %v112
    %v114 = vrot.slane %v76, 7
    %v115 = vsel %vm94, %v114, %v113
    %v116 = vrot.slane %v77, 6
    %v117 = vsel %vm97, %v116, %v115
    %v118 = vrot.slane %v78, 5
    %v119 = vsel %vm100, %v118, %v117
    %v120 = vrot.slane %v79, 4
    %v121 = vsel %vm103, %v120, %v119
    %v122 = vrot.slane %v80, 3
    %v123 = vsel %vm106, %v122, %v121
    %v124 = vrot.slane %v81, 2
    %v125 = vsel %vm109, %v124, %v123
    %v127 = vld [vmem:[%s2] sm:$0x1]
    %v128 = vld [vmem:[%s3] sm:$0x1]
    %vm129 = vcmask 261120
    %v130 = vsel %vm129, %v110, 0.0
    %131 = vadd.xlane.f32.xlu0 %v130
    %v132 = vpop.xlane.xlu0 %131
    %v133 = vsel %vm129, %v125, 0.0
    %134 = vadd.xlane.f32.xlu0 %v133
    %v135 = vpop.xlane.xlu0 %134
    %v136 = vmul.f32 %v132, 0.03125
    %v137 = vmul.f32 %v135, 0.03125
    %v138 = vsub.f32 %v110, %v136
    %v139 = vsub.f32 %v125, %v137
    %v140 = vmul.f32 %v138, %v138
    %v141 = vmul.f32 %v139, %v139
    %v142 = vsel %vm129, %v140, 0.0
    %143 = vadd.xlane.f32.xlu0 %v142
    %v144 = vpop.xlane.xlu0 %143
    %v145 = vsel %vm129, %v141, 0.0
    %146 = vadd.xlane.f32.xlu0 %v145
    %v147 = vpop.xlane.xlu0 %146
    %v148 = vmul.f32 %v144, 0.03125
    %v149 = vmul.f32 %v147, 0.03125
    %v150 = vadd.f32 %v148, 1e-05
    %v151 = vadd.f32 %v149, 1e-05
    %v152 = vrsqrt.pop %v150
    %v153 = vrsqrt.pop %v151
    %v154 = vmul.f32 %v138, %v152
    %v155 = vmul.f32 %v139, %v153
    %v157 = vlaneseq
    %v158 = vshrl.u32 %v157, 7
    %v159 = vsub.s32 0, %v158
    %v160 = vrot.slane %v127, %v159
    %v162 = vmul.f32 %v154, %v160
    %v163 = vmul.f32 %v155, %v160
    %v165 = vlaneseq
    %v166 = vshrl.u32 %v165, 7
    %v167 = vsub.s32 0, %v166
    %v168 = vrot.slane %v128, %v167
    %v170 = vadd.f32 %v162, %v168
    %v171 = vadd.f32 %v163, %v168
    %v172 = vld [vmem:[%s4] sm:$0xff]
    %v173 = vld [vmem:[%s4 + $0x8] sm:$0xff]
    %v174 = vld [vmem:[%s4 + $0x10] sm:$0xff]
    %v175 = vld [vmem:[%s4 + $0x18] sm:$0xff]
    %v176 = vld [vmem:[%s5] sm:$0x1]
    %v178 = vlaneseq
    %v179 = vshrl.u32 %v178, 7
    %v180 = vsub.s32 0, %v179
    %v181 = vrot.slane %v176, %v180
    %v184 = vsel %vm129, %v170, 0
    %v187 = vsel %vm129, %v171, 0
    %189 = vmatprep.subr.mxu0 0.0
    %190 = vmatpush1.msra.mxu0 0.0
    %191 = vmatprep.subr.mxu0 0.0
    %192 = vmatpush1.msra.mxu0 0.0
    %193 = vmatprep.subr.mxu0 0.0
    %194 = vmatpush1.msra.mxu0 0.0
    %195 = vmatprep.subr.mxu0 0.0
    %196 = vmatpush1.msra.mxu0 0.0
    %197 = vmatprep.subr.mxu0 0.0
    %198 = vmatpush1.msra.mxu0 0.0
    %199 = vmatprep.subr.mxu0 0.0
    %200 = vmatpush1.msra.mxu0 0.0
    %201 = vmatprep.subr.mxu0 0.0
    %202 = vmatpush1.msra.mxu0 0.0
    %203 = vmatprep.subr.mxu0 0.0
    %204 = vmatpush1.msra.mxu0 0.0
    %205 = vmatprep.subr.mxu0 0.0
    %206 = vmatpush1.msra.mxu0 0.0
    %207 = vmatprep.subr.mxu0 0.0
    %208 = vmatpush1.msra.mxu0 0.0
    %209 = vmatprep.subr.mxu0 0.0
    %210 = vmatpush1.msra.mxu0 0.0
    %211 = vmatprep.subr.mxu0 0.0
    %212 = vmatpush1.msra.mxu0 0.0
    %213 = vmatprep.subr.mxu0 0.0
    %214 = vmatpush1.msra.mxu0 %v175
    %215 = vmatprep.subr.mxu0 0.0
    %216 = vmatpush1.msra.mxu0 %v174
    %217 = vmatprep.subr.mxu0 0.0
    %218 = vmatpush1.msra.mxu0 %v173
    %219 = vmatprep.subr.mxu0 0.0
    %220 = vmatpush1.msra.mxu0 %v172
    %221 = vmatprep.subr.mxu0 0.0
    %222 = vmatpush2.msra.mxu0 0.0
    %223 = vmatprep.subr.mxu0 0.0
    %224 = vmatpush2.msra.mxu0 0.0
    %225 = vmatprep.subr.mxu0 0.0
    %226 = vmatpush2.msra.mxu0 0.0
    %227 = vmatprep.subr.mxu0 0.0
    %228 = vmatpush2.msra.mxu0 0.0
    %229 = vmatprep.subr.mxu0 0.0
    %230 = vmatpush2.msra.mxu0 0.0
    %231 = vmatprep.subr.mxu0 0.0
    %232 = vmatpush2.msra.mxu0 0.0
    %233 = vmatprep.subr.mxu0 0.0
    %234 = vmatpush2.msra.mxu0 0.0
    %235 = vmatprep.subr.mxu0 0.0
    %236 = vmatpush2.msra.mxu0 0.0
    %237 = vmatprep.subr.mxu0 0.0
    %238 = vmatpush2.msra.mxu0 0.0
    %239 = vmatprep.subr.mxu0 0.0
    %240 = vmatpush2.msra.mxu0 0.0
    %241 = vmatprep.subr.mxu0 0.0
    %242 = vmatpush2.msra.mxu0 0.0
    %243 = vmatprep.subr.mxu0 0.0
    %244 = vmatpush2.msra.mxu0 0.0
    %245 = vmatprep.subr.mxu0 0.0
    %246 = vmatpush2.msra.mxu0 0.0
    %247 = vmatprep.subr.mxu0 0.0
    %248 = vmatpush2.msra.mxu0 0.0
    %249 = vmatprep.subr.mxu0 0.0
    %250 = vmatpush2.msra.mxu0 0.0
    %251 = vmatprep.subr.mxu0 0.0
    %252 = vmatpush2.msra.mxu0 0.0
    %253 = vmatprep.mubr.f32.mxu0 0.0
    %254 = vmatmul.mubr.f32.gmra.mxu0 %v184
    %v255 = vpop.f32.mrf.mxu0
    %v256 = vadd.f32 %v181, %v255
    %v257 = vpop.f32.mrf.mxu0
    %258 = vmatprep.mubr.f32.mxu0 0.0
    %259 = vmatmul.mubr.f32.gmra.mxu0 %v187
    %v260 = vpop.f32.mrf.mxu0
    %v261 = vadd.f32 %v181, %v260
    %v262 = vpop.f32.mrf.mxu0
    %263 = vdwg.mxu0
    %v264 = vmul.f32 %v256, 0.17677669
    %v265 = vmul.f32 %v261, 0.17677669
    %v266 = vld [vmem:[#allocation5] sm:$0x3]
    %vm267 = vcmp.gt.f32.partialorder %v266, 0.5
    %v268 = vsel %vm267, 1, 0
    %v270 = vunpack.c.l.s4 1966171168
    %v271 = vunpack.c.0.s8 %v270
    %v272 = vlaneseq
    %v273 = vshrl.u32 %v272, 7
    %v274 = vsub.s32 %v271, %v273
    %v275 = vrot.slane %v268, %v274
    %v276 = vcombine.high %v275, %v275
    %v278 = vunpack.c.l.s4 1966171168
    %v279 = vunpack.c.0.s8 %v278
    %v280 = vlaneseq
    %v281 = vshrl.u32 %v280, 7
    %v282 = vsub.s32 %v279, %v281
    %v283 = vrot.slane %v275, %v282
    %v285 = vunpack.c.l.s4 1966171168
    %v286 = vunpack.c.0.s8 %v285
    %v287 = vlaneseq
    %v288 = vshrl.u32 %v287, 7
    %v289 = vsub.s32 %v286, %v288
    %v290 = vrot.slane %v276, %v289
    %vm291 = vcmp.ne.s32.totalorder %v283, 0
    %vm292 = vcmp.ne.s32.totalorder %v290, 0
    %294 = vrot.lane.b32.xlu0 %v256, 96
    %v295 = vpop.permute.xlu0 %294
    %vm296 = vcmask 64512
    %v298 = vsel %vm296, %v264, 0
    %v300 = vsel %vm296, %v295, 0
    %302 = vmatprep.subr.mxu0 0.0
    %303 = vmatpush1.xpose.msra.mxu0 0.0
    %304 = vmatprep.subr.mxu0 0.0
    %305 = vmatpush1.xpose.msra.mxu0 0.0
    %306 = vmatprep.subr.mxu0 0.0
    %307 = vmatpush1.xpose.msra.mxu0 0.0
    %308 = vmatprep.subr.mxu0 0.0
    %309 = vmatpush1.xpose.msra.mxu0 0.0
    %310 = vmatprep.subr.mxu0 0.0
    %311 = vmatpush1.xpose.msra.mxu0 0.0
    %312 = vmatprep.subr.mxu0 0.0
    %313 = vmatpush1.xpose.msra.mxu0 0.0
    %314 = vmatprep.subr.mxu0 0.0
    %315 = vmatpush1.xpose.msra.mxu0 0.0
    %316 = vmatprep.subr.mxu0 0.0
    %317 = vmatpush1.xpose.msra.mxu0 0.0
    %318 = vmatprep.subr.mxu0 0.0
    %319 = vmatpush1.xpose.msra.mxu0 0.0
    %320 = vmatprep.subr.mxu0 0.0
    %321 = vmatpush1.xpose.msra.mxu0 0.0
    %322 = vmatprep.subr.mxu0 0.0
    %323 = vmatpush1.xpose.msra.mxu0 0.0
    %324 = vmatprep.subr.mxu0 0.0
    %325 = vmatpush1.xpose.msra.mxu0 0.0
    %326 = vmatprep.subr.mxu0 0.0
    %327 = vmatpush1.xpose.msra.mxu0 0.0
    %328 = vmatprep.subr.mxu0 0.0
    %329 = vmatpush1.xpose.msra.mxu0 0.0
    %330 = vmatprep.subr.mxu0 0.0
    %331 = vmatpush1.xpose.msra.mxu0 0.0
    %332 = vmatprep.subr.mxu0 0.0
    %333 = vmatpush1.xpose.msra.mxu0 %v300
    %334 = vmatprep.subr.mxu0 0.0
    %335 = vmatpush2.xpose.msra.mxu0 0.0
    %336 = vmatprep.subr.mxu0 0.0
    %337 = vmatpush2.xpose.msra.mxu0 0.0
    %338 = vmatprep.subr.mxu0 0.0
    %339 = vmatpush2.xpose.msra.mxu0 0.0
    %340 = vmatprep.subr.mxu0 0.0
    %341 = vmatpush2.xpose.msra.mxu0 0.0
    %342 = vmatprep.subr.mxu0 0.0
    %343 = vmatpush2.xpose.msra.mxu0 0.0
    %344 = vmatprep.subr.mxu0 0.0
    %345 = vmatpush2.xpose.msra.mxu0 0.0
    %346 = vmatprep.subr.mxu0 0.0
    %347 = vmatpush2.xpose.msra.mxu0 0.0
    %348 = vmatprep.subr.mxu0 0.0
    %349 = vmatpush2.xpose.msra.mxu0 0.0
    %350 = vmatprep.subr.mxu0 0.0
    %351 = vmatpush2.xpose.msra.mxu0 0.0
    %352 = vmatprep.subr.mxu0 0.0
    %353 = vmatpush2.xpose.msra.mxu0 0.0
    %354 = vmatprep.subr.mxu0 0.0
    %355 = vmatpush2.xpose.msra.mxu0 0.0
    %356 = vmatprep.subr.mxu0 0.0
    %357 = vmatpush2.xpose.msra.mxu0 0.0
    %358 = vmatprep.subr.mxu0 0.0
    %359 = vmatpush2.xpose.msra.mxu0 0.0
    %360 = vmatprep.subr.mxu0 0.0
    %361 = vmatpush2.xpose.msra.mxu0 0.0
    %362 = vmatprep.subr.mxu0 0.0
    %363 = vmatpush2.xpose.msra.mxu0 0.0
    %364 = vmatprep.subr.mxu0 0.0
    %365 = vmatpush2.xpose.msra.mxu0 0.0
    %366 = vmatprep.mubr.f32.mxu0 0.0
    %367 = vmatmul.mubr.f32.gmra.mxu0 %v298
    %v368 = vpop.f32.mrf.mxu0
    %v369 = vadd.f32 0.0, %v368
    %v370 = vpop.f32.mrf.mxu0
    %371 = vdwg.mxu0
    %373 = vrot.lane.b32.xlu0 %v261, 96
    %v374 = vpop.permute.xlu0 %373
    %v376 = vsel %vm296, %v265, 0
    %v378 = vsel %vm296, %v374, 0
    %380 = vmatprep.subr.mxu0 0.0
    %381 = vmatpush1.xpose.msra.mxu0 0.0
    %382 = vmatprep.subr.mxu0 0.0
    %383 = vmatpush1.xpose.msra.mxu0 0.0
    %384 = vmatprep.subr.mxu0 0.0
    %385 = vmatpush1.xpose.msra.mxu0 0.0
    %386 = vmatprep.subr.mxu0 0.0
    %387 = vmatpush1.xpose.msra.mxu0 0.0
    %388 = vmatprep.subr.mxu0 0.0
    %389 = vmatpush1.xpose.msra.mxu0 0.0
    %390 = vmatprep.subr.mxu0 0.0
    %391 = vmatpush1.xpose.msra.mxu0 0.0
    %392 = vmatprep.subr.mxu0 0.0
    %393 = vmatpush1.xpose.msra.mxu0 0.0
    %394 = vmatprep.subr.mxu0 0.0
    %395 = vmatpush1.xpose.msra.mxu0 0.0
    %396 = vmatprep.subr.mxu0 0.0
    %397 = vmatpush1.xpose.msra.mxu0 0.0
    %398 = vmatprep.subr.mxu0 0.0
    %399 = vmatpush1.xpose.msra.mxu0 0.0
    %400 = vmatprep.subr.mxu0 0.0
    %401 = vmatpush1.xpose.msra.mxu0 0.0
    %402 = vmatprep.subr.mxu0 0.0
    %403 = vmatpush1.xpose.msra.mxu0 0.0
    %404 = vmatprep.subr.mxu0 0.0
    %405 = vmatpush1.xpose.msra.mxu0 0.0
    %406 = vmatprep.subr.mxu0 0.0
    %407 = vmatpush1.xpose.msra.mxu0 0.0
    %408 = vmatprep.subr.mxu0 0.0
    %409 = vmatpush1.xpose.msra.mxu0 0.0
    %410 = vmatprep.subr.mxu0 0.0
    %411 = vmatpush1.xpose.msra.mxu0 %v378
    %412 = vmatprep.subr.mxu0 0.0
    %413 = vmatpush2.xpose.msra.mxu0 0.0
    %414 = vmatprep.subr.mxu0 0.0
    %415 = vmatpush2.xpose.msra.mxu0 0.0
    %416 = vmatprep.subr.mxu0 0.0
    %417 = vmatpush2.xpose.msra.mxu0 0.0
    %418 = vmatprep.subr.mxu0 0.0
    %419 = vmatpush2.xpose.msra.mxu0 0.0
    %420 = vmatprep.subr.mxu0 0.0
    %421 = vmatpush2.xpose.msra.mxu0 0.0
    %422 = vmatprep.subr.mxu0 0.0
    %423 = vmatpush2.xpose.msra.mxu0 0.0
    %424 = vmatprep.subr.mxu0 0.0
    %425 = vmatpush2.xpose.msra.mxu0 0.0
    %426 = vmatprep.subr.mxu0 0.0
    %427 = vmatpush2.xpose.msra.mxu0 0.0
    %428 = vmatprep.subr.mxu0 0.0
    %429 = vmatpush2.xpose.msra.mxu0 0.0
    %430 = vmatprep.subr.mxu0 0.0
    %431 = vmatpush2.xpose.msra.mxu0 0.0
    %432 = vmatprep.subr.mxu0 0.0
    %433 = vmatpush2.xpose.msra.mxu0 0.0
    %434 = vmatprep.subr.mxu0 0.0
    %435 = vmatpush2.xpose.msra.mxu0 0.0
    %436 = vmatprep.subr.mxu0 0.0
    %437 = vmatpush2.xpose.msra.mxu0 0.0
    %438 = vmatprep.subr.mxu0 0.0
    %439 = vmatpush2.xpose.msra.mxu0 0.0
    %440 = vmatprep.subr.mxu0 0.0
    %441 = vmatpush2.xpose.msra.mxu0 0.0
    %442 = vmatprep.subr.mxu0 0.0
    %443 = vmatpush2.xpose.msra.mxu0 0.0
    %444 = vmatprep.mubr.f32.mxu0 0.0
    %445 = vmatmul.mubr.f32.gmra.mxu0 %v376
    %v446 = vpop.f32.mrf.mxu0
    %v447 = vadd.f32 0.0, %v446
    %v448 = vpop.f32.mrf.mxu0
    %449 = vdwg.mxu0
    %v450 = vsel %vm291, 1, 0
    %v451 = vsel %vm292, 1, 0
    %v452 = vlaneseq
    %v453 = vshrl.u32 %v452, 7
    %v454 = vsub.s32 0, %v453
    %v455 = vrot.slane %v450, %v454
    %v456 = vlaneseq
    %v457 = vshrl.u32 %v456, 7
    %v458 = vsub.s32 0, %v457
    %v459 = vrot.slane %v451, %v458
    %vm460 = vcmp.eq.s32.totalorder %v455, 1
    %vm461 = vcmp.eq.s32.totalorder %v459, 1
    %v462 = vsel %vm460, -100000.0, %v369
    %v463 = vsel %vm461, -100000.0, %v447
    %v464 = vsel %vm296, %v462, -inf
    %465 = vmax.xlane.f32.xlu0 %v464
    %v466 = vpop.xlane.xlu0 %465
    %v467 = vsel %vm296, %v463, -inf
    %468 = vmax.xlane.f32.xlu0 %v467
    %v469 = vpop.xlane.xlu0 %468
    %v470 = vsub.f32 %v462, %v466
    %v471 = vsub.f32 %v463, %v469
    %v472 = vmul.f32 %v470, 1.442695
    %v473 = vpow.pop %v472
    %v474 = vmul.f32 %v471, 1.442695
    %v475 = vpow.pop %v474
    %v476 = vsel %vm296, %v473, 0.0
    %477 = vadd.xlane.f32.xlu0 %v476
    %v478 = vpop.xlane.xlu0 %477
    %v479 = vsel %vm296, %v475, 0.0
    %480 = vadd.xlane.f32.xlu0 %v479
    %v481 = vpop.xlane.xlu0 %480
    %v482 = vrcp.pop %v478
    %v483 = vmul.f32 %v473, %v482
    %v484 = vrcp.pop %v481
    %v485 = vmul.f32 %v475, %v484
    %486 = vrot.lane.b32.xlu0 %v256, 64
    %v487 = vpop.permute.xlu0 %486
    %v490 = vsel %vm296, %v483, 0
    %492 = vmatprep.subr.mxu0 0.0
    %493 = vmatpush1.msra.mxu0 0.0
    %494 = vmatprep.subr.mxu0 0.0
    %495 = vmatpush1.msra.mxu0 0.0
    %496 = vmatprep.subr.mxu0 0.0
    %497 = vmatpush1.msra.mxu0 0.0
    %498 = vmatprep.subr.mxu0 0.0
    %499 = vmatpush1.msra.mxu0 0.0
    %500 = vmatprep.subr.mxu0 0.0
    %501 = vmatpush1.msra.mxu0 0.0
    %502 = vmatprep.subr.mxu0 0.0
    %503 = vmatpush1.msra.mxu0 0.0
    %504 = vmatprep.subr.mxu0 0.0
    %505 = vmatpush1.msra.mxu0 0.0
    %506 = vmatprep.subr.mxu0 0.0
    %507 = vmatpush1.msra.mxu0 0.0
    %508 = vmatprep.subr.mxu0 0.0
    %509 = vmatpush1.msra.mxu0 0.0
    %510 = vmatprep.subr.mxu0 0.0
    %511 = vmatpush1.msra.mxu0 0.0
    %512 = vmatprep.subr.mxu0 0.0
    %513 = vmatpush1.msra.mxu0 0.0
    %514 = vmatprep.subr.mxu0 0.0
    %515 = vmatpush1.msra.mxu0 0.0
    %516 = vmatprep.subr.mxu0 0.0
    %517 = vmatpush1.msra.mxu0 0.0
    %518 = vmatprep.subr.mxu0 0.0
    %519 = vmatpush1.msra.mxu0 0.0
    %520 = vmatprep.subr.mxu0 0.0
    %521 = vmatpush1.msra.mxu0 0.0
    %522 = vmatprep.subr.mxu0 0.0
    %523 = vmatpush1.msra.mxu0 %v487
    %524 = vmatprep.subr.mxu0 0.0
    %525 = vmatpush2.msra.mxu0 0.0
    %526 = vmatprep.subr.mxu0 0.0
    %527 = vmatpush2.msra.mxu0 0.0
    %528 = vmatprep.subr.mxu0 0.0
    %529 = vmatpush2.msra.mxu0 0.0
    %530 = vmatprep.subr.mxu0 0.0
    %531 = vmatpush2.msra.mxu0 0.0
    %532 = vmatprep.subr.mxu0 0.0
    %533 = vmatpush2.msra.mxu0 0.0
    %534 = vmatprep.subr.mxu0 0.0
    %535 = vmatpush2.msra.mxu0 0.0
    %536 = vmatprep.subr.mxu0 0.0
    %537 = vmatpush2.msra.mxu0 0.0
    %538 = vmatprep.subr.mxu0 0.0
    %539 = vmatpush2.msra.mxu0 0.0
    %540 = vmatprep.subr.mxu0 0.0
    %541 = vmatpush2.msra.mxu0 0.0
    %542 = vmatprep.subr.mxu0 0.0
    %543 = vmatpush2.msra.mxu0 0.0
    %544 = vmatprep.subr.mxu0 0.0
    %545 = vmatpush2.msra.mxu0 0.0
    %546 = vmatprep.subr.mxu0 0.0
    %547 = vmatpush2.msra.mxu0 0.0
    %548 = vmatprep.subr.mxu0 0.0
    %549 = vmatpush2.msra.mxu0 0.0
    %550 = vmatprep.subr.mxu0 0.0
    %551 = vmatpush2.msra.mxu0 0.0
    %552 = vmatprep.subr.mxu0 0.0
    %553 = vmatpush2.msra.mxu0 0.0
    %554 = vmatprep.subr.mxu0 0.0
    %555 = vmatpush2.msra.mxu0 0.0
    %556 = vmatprep.mubr.f32.mxu0 0.0
    %557 = vmatmul.mubr.f32.gmra.mxu0 %v490
    %v558 = vpop.f32.mrf.mxu0
    %v559 = vadd.f32 0.0, %v558
    %v560 = vpop.f32.mrf.mxu0
    %561 = vdwg.mxu0
    %562 = vrot.lane.b32.xlu0 %v261, 64
    %v563 = vpop.permute.xlu0 %562
    %v566 = vsel %vm296, %v485, 0
    %568 = vmatprep.subr.mxu0 0.0
    %569 = vmatpush1.msra.mxu0 0.0
    %570 = vmatprep.subr.mxu0 0.0
    %571 = vmatpush1.msra.mxu0 0.0
    %572 = vmatprep.subr.mxu0 0.0
    %573 = vmatpush1.msra.mxu0 0.0
    %574 = vmatprep.subr.mxu0 0.0
    %575 = vmatpush1.msra.mxu0 0.0
    %576 = vmatprep.subr.mxu0 0.0
    %577 = vmatpush1.msra.mxu0 0.0
    %578 = vmatprep.subr.mxu0 0.0
    %579 = vmatpush1.msra.mxu0 0.0
    %580 = vmatprep.subr.mxu0 0.0
    %581 = vmatpush1.msra.mxu0 0.0
    %582 = vmatprep.subr.mxu0 0.0
    %583 = vmatpush1.msra.mxu0 0.0
    %584 = vmatprep.subr.mxu0 0.0
    %585 = vmatpush1.msra.mxu0 0.0
    %586 = vmatprep.subr.mxu0 0.0
    %587 = vmatpush1.msra.mxu0 0.0
    %588 = vmatprep.subr.mxu0 0.0
    %589 = vmatpush1.msra.mxu0 0.0
    %590 = vmatprep.subr.mxu0 0.0
    %591 = vmatpush1.msra.mxu0 0.0
    %592 = vmatprep.subr.mxu0 0.0
    %593 = vmatpush1.msra.mxu0 0.0
    %594 = vmatprep.subr.mxu0 0.0
    %595 = vmatpush1.msra.mxu0 0.0
    %596 = vmatprep.subr.mxu0 0.0
    %597 = vmatpush1.msra.mxu0 0.0
    %598 = vmatprep.subr.mxu0 0.0
    %599 = vmatpush1.msra.mxu0 %v563
    %600 = vmatprep.subr.mxu0 0.0
    %601 = vmatpush2.msra.mxu0 0.0
    %602 = vmatprep.subr.mxu0 0.0
    %603 = vmatpush2.msra.mxu0 0.0
    %604 = vmatprep.subr.mxu0 0.0
    %605 = vmatpush2.msra.mxu0 0.0
    %606 = vmatprep.subr.mxu0 0.0
    %607 = vmatpush2.msra.mxu0 0.0
    %608 = vmatprep.subr.mxu0 0.0
    %609 = vmatpush2.msra.mxu0 0.0
    %610 = vmatprep.subr.mxu0 0.0
    %611 = vmatpush2.msra.mxu0 0.0
    %612 = vmatprep.subr.mxu0 0.0
    %613 = vmatpush2.msra.mxu0 0.0
    %614 = vmatprep.subr.mxu0 0.0
    %615 = vmatpush2.msra.mxu0 0.0
    %616 = vmatprep.subr.mxu0 0.0
    %617 = vmatpush2.msra.mxu0 0.0
    %618 = vmatprep.subr.mxu0 0.0
    %619 = vmatpush2.msra.mxu0 0.0
    %620 = vmatprep.subr.mxu0 0.0
    %621 = vmatpush2.msra.mxu0 0.0
    %622 = vmatprep.subr.mxu0 0.0
    %623 = vmatpush2.msra.mxu0 0.0
    %624 = vmatprep.subr.mxu0 0.0
    %625 = vmatpush2.msra.mxu0 0.0
    %626 = vmatprep.subr.mxu0 0.0
    %627 = vmatpush2.msra.mxu0 0.0
    %628 = vmatprep.subr.mxu0 0.0
    %629 = vmatpush2.msra.mxu0 0.0
    %630 = vmatprep.subr.mxu0 0.0
    %631 = vmatpush2.msra.mxu0 0.0
    %632 = vmatprep.mubr.f32.mxu0 0.0
    %633 = vmatmul.mubr.f32.gmra.mxu0 %v566
    %v634 = vpop.f32.mrf.mxu0
    %v635 = vadd.f32 0.0, %v634
    %v636 = vpop.f32.mrf.mxu0
    %637 = vdwg.mxu0
    %638 = vrot.lane.b32.xlu0 %v264, 120
    %v639 = vpop.permute.xlu0 %638
    %640 = vrot.lane.b32.xlu0 %v256, 88
    %v641 = vpop.permute.xlu0 %640
    %v642 = vsel %vm296, %v639, 0
    %v644 = vsel %vm296, %v641, 0
    %646 = vmatprep.subr.mxu0 0.0
    %647 = vmatpush1.xpose.msra.mxu0 0.0
    %648 = vmatprep.subr.mxu0 0.0
    %649 = vmatpush1.xpose.msra.mxu0 0.0
    %650 = vmatprep.subr.mxu0 0.0
    %651 = vmatpush1.xpose.msra.mxu0 0.0
    %652 = vmatprep.subr.mxu0 0.0
    %653 = vmatpush1.xpose.msra.mxu0 0.0
    %654 = vmatprep.subr.mxu0 0.0
    %655 = vmatpush1.xpose.msra.mxu0 0.0
    %656 = vmatprep.subr.mxu0 0.0
    %657 = vmatpush1.xpose.msra.mxu0 0.0
    %658 = vmatprep.subr.mxu0 0.0
    %659 = vmatpush1.xpose.msra.mxu0 0.0
    %660 = vmatprep.subr.mxu0 0.0
    %661 = vmatpush1.xpose.msra.mxu0 0.0
    %662 = vmatprep.subr.mxu0 0.0
    %663 = vmatpush1.xpose.msra.mxu0 0.0
    %664 = vmatprep.subr.mxu0 0.0
    %665 = vmatpush1.xpose.msra.mxu0 0.0
    %666 = vmatprep.subr.mxu0 0.0
    %667 = vmatpush1.xpose.msra.mxu0 0.0
    %668 = vmatprep.subr.mxu0 0.0
    %669 = vmatpush1.xpose.msra.mxu0 0.0
    %670 = vmatprep.subr.mxu0 0.0
    %671 = vmatpush1.xpose.msra.mxu0 0.0
    %672 = vmatprep.subr.mxu0 0.0
    %673 = vmatpush1.xpose.msra.mxu0 0.0
    %674 = vmatprep.subr.mxu0 0.0
    %675 = vmatpush1.xpose.msra.mxu0 0.0
    %676 = vmatprep.subr.mxu0 0.0
    %677 = vmatpush1.xpose.msra.mxu0 %v644
    %678 = vmatprep.subr.mxu0 0.0
    %679 = vmatpush2.xpose.msra.mxu0 0.0
    %680 = vmatprep.subr.mxu0 0.0
    %681 = vmatpush2.xpose.msra.mxu0 0.0
    %682 = vmatprep.subr.mxu0 0.0
    %683 = vmatpush2.xpose.msra.mxu0 0.0
    %684 = vmatprep.subr.mxu0 0.0
    %685 = vmatpush2.xpose.msra.mxu0 0.0
    %686 = vmatprep.subr.mxu0 0.0
    %687 = vmatpush2.xpose.msra.mxu0 0.0
    %688 = vmatprep.subr.mxu0 0.0
    %689 = vmatpush2.xpose.msra.mxu0 0.0
    %690 = vmatprep.subr.mxu0 0.0
    %691 = vmatpush2.xpose.msra.mxu0 0.0
    %692 = vmatprep.subr.mxu0 0.0
    %693 = vmatpush2.xpose.msra.mxu0 0.0
    %694 = vmatprep.subr.mxu0 0.0
    %695 = vmatpush2.xpose.msra.mxu0 0.0
    %696 = vmatprep.subr.mxu0 0.0
    %697 = vmatpush2.xpose.msra.mxu0 0.0
    %698 = vmatprep.subr.mxu0 0.0
    %699 = vmatpush2.xpose.msra.mxu0 0.0
    %700 = vmatprep.subr.mxu0 0.0
    %701 = vmatpush2.xpose.msra.mxu0 0.0
    %702 = vmatprep.subr.mxu0 0.0
    %703 = vmatpush2.xpose.msra.mxu0 0.0
    %704 = vmatprep.subr.mxu0 0.0
    %705 = vmatpush2.xpose.msra.mxu0 0.0
    %706 = vmatprep.subr.mxu0 0.0
    %707 = vmatpush2.xpose.msra.mxu0 0.0
    %708 = vmatprep.subr.mxu0 0.0
    %709 = vmatpush2.xpose.msra.mxu0 0.0
    %710 = vmatprep.mubr.f32.mxu0 0.0
    %711 = vmatmul.mubr.f32.gmra.mxu0 %v642
    %v712 = vpop.f32.mrf.mxu0
    %v713 = vadd.f32 0.0, %v712
    %v714 = vpop.f32.mrf.mxu0
    %715 = vdwg.mxu0
    %716 = vrot.lane.b32.xlu0 %v265, 120
    %v717 = vpop.permute.xlu0 %716
    %718 = vrot.lane.b32.xlu0 %v261, 88
    %v719 = vpop.permute.xlu0 %718
    %v720 = vsel %vm296, %v717, 0
    %v722 = vsel %vm296, %v719, 0
    %724 = vmatprep.subr.mxu0 0.0
    %725 = vmatpush1.xpose.msra.mxu0 0.0
    %726 = vmatprep.subr.mxu0 0.0
    %727 = vmatpush1.xpose.msra.mxu0 0.0
    %728 = vmatprep.subr.mxu0 0.0
    %729 = vmatpush1.xpose.msra.mxu0 0.0
    %730 = vmatprep.subr.mxu0 0.0
    %731 = vmatpush1.xpose.msra.mxu0 0.0
    %732 = vmatprep.subr.mxu0 0.0
    %733 = vmatpush1.xpose.msra.mxu0 0.0
    %734 = vmatprep.subr.mxu0 0.0
    %735 = vmatpush1.xpose.msra.mxu0 0.0
    %736 = vmatprep.subr.mxu0 0.0
    %737 = vmatpush1.xpose.msra.mxu0 0.0
    %738 = vmatprep.subr.mxu0 0.0
    %739 = vmatpush1.xpose.msra.mxu0 0.0
    %740 = vmatprep.subr.mxu0 0.0
    %741 = vmatpush1.xpose.msra.mxu0 0.0
    %742 = vmatprep.subr.mxu0 0.0
    %743 = vmatpush1.xpose.msra.mxu0 0.0
    %744 = vmatprep.subr.mxu0 0.0
    %745 = vmatpush1.xpose.msra.mxu0 0.0
    %746 = vmatprep.subr.mxu0 0.0
    %747 = vmatpush1.xpose.msra.mxu0 0.0
    %748 = vmatprep.subr.mxu0 0.0
    %749 = vmatpush1.xpose.msra.mxu0 0.0
    %750 = vmatprep.subr.mxu0 0.0
    %751 = vmatpush1.xpose.msra.mxu0 0.0
    %752 = vmatprep.subr.mxu0 0.0
    %753 = vmatpush1.xpose.msra.mxu0 0.0
    %754 = vmatprep.subr.mxu0 0.0
    %755 = vmatpush1.xpose.msra.mxu0 %v722
    %756 = vmatprep.subr.mxu0 0.0
    %757 = vmatpush2.xpose.msra.mxu0 0.0
    %758 = vmatprep.subr.mxu0 0.0
    %759 = vmatpush2.xpose.msra.mxu0 0.0
    %760 = vmatprep.subr.mxu0 0.0
    %761 = vmatpush2.xpose.msra.mxu0 0.0
    %762 = vmatprep.subr.mxu0 0.0
    %763 = vmatpush2.xpose.msra.mxu0 0.0
    %764 = vmatprep.subr.mxu0 0.0
    %765 = vmatpush2.xpose.msra.mxu0 0.0
    %766 = vmatprep.subr.mxu0 0.0
    %767 = vmatpush2.xpose.msra.mxu0 0.0
    %768 = vmatprep.subr.mxu0 0.0
    %769 = vmatpush2.xpose.msra.mxu0 0.0
    %770 = vmatprep.subr.mxu0 0.0
    %771 = vmatpush2.xpose.msra.mxu0 0.0
    %772 = vmatprep.subr.mxu0 0.0
    %773 = vmatpush2.xpose.msra.mxu0 0.0
    %774 = vmatprep.subr.mxu0 0.0
    %775 = vmatpush2.xpose.msra.mxu0 0.0
    %776 = vmatprep.subr.mxu0 0.0
    %777 = vmatpush2.xpose.msra.mxu0 0.0
    %778 = vmatprep.subr.mxu0 0.0
    %779 = vmatpush2.xpose.msra.mxu0 0.0
    %780 = vmatprep.subr.mxu0 0.0
    %781 = vmatpush2.xpose.msra.mxu0 0.0
    %782 = vmatprep.subr.mxu0 0.0
    %783 = vmatpush2.xpose.msra.mxu0 0.0
    %784 = vmatprep.subr.mxu0 0.0
    %785 = vmatpush2.xpose.msra.mxu0 0.0
    %786 = vmatprep.subr.mxu0 0.0
    %787 = vmatpush2.xpose.msra.mxu0 0.0
    %788 = vmatprep.mubr.f32.mxu0 0.0
    %789 = vmatmul.mubr.f32.gmra.mxu0 %v720
    %v790 = vpop.f32.mrf.mxu0
    %v791 = vadd.f32 0.0, %v790
    %v792 = vpop.f32.mrf.mxu0
    %793 = vdwg.mxu0
    %v794 = vsel %vm460, -100000.0, %v713
    %v795 = vsel %vm461, -100000.0, %v791
    %v796 = vsel %vm296, %v794, -inf
    %797 = vmax.xlane.f32.xlu0 %v796
    %v798 = vpop.xlane.xlu0 %797
    %v799 = vsel %vm296, %v795, -inf
    %800 = vmax.xlane.f32.xlu0 %v799
    %v801 = vpop.xlane.xlu0 %800
    %v802 = vsub.f32 %v794, %v798
    %v803 = vsub.f32 %v795, %v801
    %v804 = vmul.f32 %v802, 1.442695
    %v805 = vpow.pop %v804
    %v806 = vmul.f32 %v803, 1.442695
    %v807 = vpow.pop %v806
    %v808 = vsel %vm296, %v805, 0.0
    %809 = vadd.xlane.f32.xlu0 %v808
    %v810 = vpop.xlane.xlu0 %809
    %v811 = vsel %vm296, %v807, 0.0
    %812 = vadd.xlane.f32.xlu0 %v811
    %v813 = vpop.xlane.xlu0 %812
    %v814 = vrcp.pop %v810
    %v815 = vmul.f32 %v805, %v814
    %v816 = vrcp.pop %v813
    %v817 = vmul.f32 %v807, %v816
    %818 = vrot.lane.b32.xlu0 %v256, 56
    %v819 = vpop.permute.xlu0 %818
    %v822 = vsel %vm296, %v815, 0
    %824 = vmatprep.subr.mxu0 0.0
    %825 = vmatpush1.msra.mxu0 0.0
    %826 = vmatprep.subr.mxu0 0.0
    %827 = vmatpush1.msra.mxu0 0.0
    %828 = vmatprep.subr.mxu0 0.0
    %829 = vmatpush1.msra.mxu0 0.0
    %830 = vmatprep.subr.mxu0 0.0
    %831 = vmatpush1.msra.mxu0 0.0
    %832 = vmatprep.subr.mxu0 0.0
    %833 = vmatpush1.msra.mxu0 0.0
    %834 = vmatprep.subr.mxu0 0.0
    %835 = vmatpush1.msra.mxu0 0.0
    %836 = vmatprep.subr.mxu0 0.0
    %837 = vmatpush1.msra.mxu0 0.0
    %838 = vmatprep.subr.mxu0 0.0
    %839 = vmatpush1.msra.mxu0 0.0
    %840 = vmatprep.subr.mxu0 0.0
    %841 = vmatpush1.msra.mxu0 0.0
    %842 = vmatprep.subr.mxu0 0.0
    %843 = vmatpush1.msra.mxu0 0.0
    %844 = vmatprep.subr.mxu0 0.0
    %845 = vmatpush1.msra.mxu0 0.0
    %846 = vmatprep.subr.mxu0 0.0
    %847 = vmatpush1.msra.mxu0 0.0
    %848 = vmatprep.subr.mxu0 0.0
    %849 = vmatpush1.msra.mxu0 0.0
    %850 = vmatprep.subr.mxu0 0.0
    %851 = vmatpush1.msra.mxu0 0.0
    %852 = vmatprep.subr.mxu0 0.0
    %853 = vmatpush1.msra.mxu0 0.0
    %854 = vmatprep.subr.mxu0 0.0
    %855 = vmatpush1.msra.mxu0 %v819
    %856 = vmatprep.subr.mxu0 0.0
    %857 = vmatpush2.msra.mxu0 0.0
    %858 = vmatprep.subr.mxu0 0.0
    %859 = vmatpush2.msra.mxu0 0.0
    %860 = vmatprep.subr.mxu0 0.0
    %861 = vmatpush2.msra.mxu0 0.0
    %862 = vmatprep.subr.mxu0 0.0
    %863 = vmatpush2.msra.mxu0 0.0
    %864 = vmatprep.subr.mxu0 0.0
    %865 = vmatpush2.msra.mxu0 0.0
    %866 = vmatprep.subr.mxu0 0.0
    %867 = vmatpush2.msra.mxu0 0.0
    %868 = vmatprep.subr.mxu0 0.0
    %869 = vmatpush2.msra.mxu0 0.0
    %870 = vmatprep.subr.mxu0 0.0
    %871 = vmatpush2.msra.mxu0 0.0
    %872 = vmatprep.subr.mxu0 0.0
    %873 = vmatpush2.msra.mxu0 0.0
    %874 = vmatprep.subr.mxu0 0.0
    %875 = vmatpush2.msra.mxu0 0.0
    %876 = vmatprep.subr.mxu0 0.0
    %877 = vmatpush2.msra.mxu0 0.0
    %878 = vmatprep.subr.mxu0 0.0
    %879 = vmatpush2.msra.mxu0 0.0
    %880 = vmatprep.subr.mxu0 0.0
    %881 = vmatpush2.msra.mxu0 0.0
    %882 = vmatprep.subr.mxu0 0.0
    %883 = vmatpush2.msra.mxu0 0.0
    %884 = vmatprep.subr.mxu0 0.0
    %885 = vmatpush2.msra.mxu0 0.0
    %886 = vmatprep.subr.mxu0 0.0
    %887 = vmatpush2.msra.mxu0 0.0
    %888 = vmatprep.mubr.f32.mxu0 0.0
    %889 = vmatmul.mubr.f32.gmra.mxu0 %v822
    %v890 = vpop.f32.mrf.mxu0
    %v891 = vadd.f32 0.0, %v890
    %v892 = vpop.f32.mrf.mxu0
    %893 = vdwg.mxu0
    %894 = vrot.lane.b32.xlu0 %v261, 56
    %v895 = vpop.permute.xlu0 %894
    %v898 = vsel %vm296, %v817, 0
    %900 = vmatprep.subr.mxu0 0.0
    %901 = vmatpush1.msra.mxu0 0.0
    %902 = vmatprep.subr.mxu0 0.0
    %903 = vmatpush1.msra.mxu0 0.0
    %904 = vmatprep.subr.mxu0 0.0
    %905 = vmatpush1.msra.mxu0 0.0
    %906 = vmatprep.subr.mxu0 0.0
    %907 = vmatpush1.msra.mxu0 0.0
    %908 = vmatprep.subr.mxu0 0.0
    %909 = vmatpush1.msra.mxu0 0.0
    %910 = vmatprep.subr.mxu0 0.0
    %911 = vmatpush1.msra.mxu0 0.0
    %912 = vmatprep.subr.mxu0 0.0
    %913 = vmatpush1.msra.mxu0 0.0
    %914 = vmatprep.subr.mxu0 0.0
    %915 = vmatpush1.msra.mxu0 0.0
    %916 = vmatprep.subr.mxu0 0.0
    %917 = vmatpush1.msra.mxu0 0.0
    %918 = vmatprep.subr.mxu0 0.0
    %919 = vmatpush1.msra.mxu0 0.0
    %920 = vmatprep.subr.mxu0 0.0
    %921 = vmatpush1.msra.mxu0 0.0
    %922 = vmatprep.subr.mxu0 0.0
    %923 = vmatpush1.msra.mxu0 0.0
    %924 = vmatprep.subr.mxu0 0.0
    %925 = vmatpush1.msra.mxu0 0.0
    %926 = vmatprep.subr.mxu0 0.0
    %927 = vmatpush1.msra.mxu0 0.0
    %928 = vmatprep.subr.mxu0 0.0
    %929 = vmatpush1.msra.mxu0 0.0
    %930 = vmatprep.subr.mxu0 0.0
    %931 = vmatpush1.msra.mxu0 %v895
    %932 = vmatprep.subr.mxu0 0.0
    %933 = vmatpush2.msra.mxu0 0.0
    %934 = vmatprep.subr.mxu0 0.0
    %935 = vmatpush2.msra.mxu0 0.0
    %936 = vmatprep.subr.mxu0 0.0
    %937 = vmatpush2.msra.mxu0 0.0
    %938 = vmatprep.subr.mxu0 0.0
    %939 = vmatpush2.msra.mxu0 0.0
    %940 = vmatprep.subr.mxu0 0.0
    %941 = vmatpush2.msra.mxu0 0.0
    %942 = vmatprep.subr.mxu0 0.0
    %943 = vmatpush2.msra.mxu0 0.0
    %944 = vmatprep.subr.mxu0 0.0
    %945 = vmatpush2.msra.mxu0 0.0
    %946 = vmatprep.subr.mxu0 0.0
    %947 = vmatpush2.msra.mxu0 0.0
    %948 = vmatprep.subr.mxu0 0.0
    %949 = vmatpush2.msra.mxu0 0.0
    %950 = vmatprep.subr.mxu0 0.0
    %951 = vmatpush2.msra.mxu0 0.0
    %952 = vmatprep.subr.mxu0 0.0
    %953 = vmatpush2.msra.mxu0 0.0
    %954 = vmatprep.subr.mxu0 0.0
    %955 = vmatpush2.msra.mxu0 0.0
    %956 = vmatprep.subr.mxu0 0.0
    %957 = vmatpush2.msra.mxu0 0.0
    %958 = vmatprep.subr.mxu0 0.0
    %959 = vmatpush2.msra.mxu0 0.0
    %960 = vmatprep.subr.mxu0 0.0
    %961 = vmatpush2.msra.mxu0 0.0
    %962 = vmatprep.subr.mxu0 0.0
    %963 = vmatpush2.msra.mxu0 0.0
    %964 = vmatprep.mubr.f32.mxu0 0.0
    %965 = vmatmul.mubr.f32.gmra.mxu0 %v898
    %v966 = vpop.f32.mrf.mxu0
    %v967 = vadd.f32 0.0, %v966
    %v968 = vpop.f32.mrf.mxu0
    %969 = vdwg.mxu0
    %970 = vrot.lane.b32.xlu0 %v264, 112
    %v971 = vpop.permute.xlu0 %970
    %972 = vrot.lane.b32.xlu0 %v256, 80
    %v973 = vpop.permute.xlu0 %972
    %v974 = vsel %vm296, %v971, 0
    %v976 = vsel %vm296, %v973, 0
    %978 = vmatprep.subr.mxu0 0.0
    %979 = vmatpush1.xpose.msra.mxu0 0.0
    %980 = vmatprep.subr.mxu0 0.0
    %981 = vmatpush1.xpose.msra.mxu0 0.0
    %982 = vmatprep.subr.mxu0 0.0
    %983 = vmatpush1.xpose.msra.mxu0 0.0
    %984 = vmatprep.subr.mxu0 0.0
    %985 = vmatpush1.xpose.msra.mxu0 0.0
    %986 = vmatprep.subr.mxu0 0.0
    %987 = vmatpush1.xpose.msra.mxu0 0.0
    %988 = vmatprep.subr.mxu0 0.0
    %989 = vmatpush1.xpose.msra.mxu0 0.0
    %990 = vmatprep.subr.mxu0 0.0
    %991 = vmatpush1.xpose.msra.mxu0 0.0
    %992 = vmatprep.subr.mxu0 0.0
    %993 = vmatpush1.xpose.msra.mxu0 0.0
    %994 = vmatprep.subr.mxu0 0.0
    %995 = vmatpush1.xpose.msra.mxu0 0.0
    %996 = vmatprep.subr.mxu0 0.0
    %997 = vmatpush1.xpose.msra.mxu0 0.0
    %998 = vmatprep.subr.mxu0 0.0
    %999 = vmatpush1.xpose.msra.mxu0 0.0
    %1000 = vmatprep.subr.mxu0 0.0
    %1001 = vmatpush1.xpose.msra.mxu0 0.0
    %1002 = vmatprep.subr.mxu0 0.0
    %1003 = vmatpush1.xpose.msra.mxu0 0.0
    %1004 = vmatprep.subr.mxu0 0.0
    %1005 = vmatpush1.xpose.msra.mxu0 0.0
    %1006 = vmatprep.subr.mxu0 0.0
    %1007 = vmatpush1.xpose.msra.mxu0 0.0
    %1008 = vmatprep.subr.mxu0 0.0
    %1009 = vmatpush1.xpose.msra.mxu0 %v976
    %1010 = vmatprep.subr.mxu0 0.0
    %1011 = vmatpush2.xpose.msra.mxu0 0.0
    %1012 = vmatprep.subr.mxu0 0.0
    %1013 = vmatpush2.xpose.msra.mxu0 0.0
    %1014 = vmatprep.subr.mxu0 0.0
    %1015 = vmatpush2.xpose.msra.mxu0 0.0
    %1016 = vmatprep.subr.mxu0 0.0
    %1017 = vmatpush2.xpose.msra.mxu0 0.0
    %1018 = vmatprep.subr.mxu0 0.0
    %1019 = vmatpush2.xpose.msra.mxu0 0.0
    %1020 = vmatprep.subr.mxu0 0.0
    %1021 = vmatpush2.xpose.msra.mxu0 0.0
    %1022 = vmatprep.subr.mxu0 0.0
    %1023 = vmatpush2.xpose.msra.mxu0 0.0
    %1024 = vmatprep.subr.mxu0 0.0
    %1025 = vmatpush2.xpose.msra.mxu0 0.0
    %1026 = vmatprep.subr.mxu0 0.0
    %1027 = vmatpush2.xpose.msra.mxu0 0.0
    %1028 = vmatprep.subr.mxu0 0.0
    %1029 = vmatpush2.xpose.msra.mxu0 0.0
    %1030 = vmatprep.subr.mxu0 0.0
    %1031 = vmatpush2.xpose.msra.mxu0 0.0
    %1032 = vmatprep.subr.mxu0 0.0
    %1033 = vmatpush2.xpose.msra.mxu0 0.0
    %1034 = vmatprep.subr.mxu0 0.0
    %1035 = vmatpush2.xpose.msra.mxu0 0.0
    %1036 = vmatprep.subr.mxu0 0.0
    %1037 = vmatpush2.xpose.msra.mxu0 0.0
    %1038 = vmatprep.subr.mxu0 0.0
    %1039 = vmatpush2.xpose.msra.mxu0 0.0
    %1040 = vmatprep.subr.mxu0 0.0
    %1041 = vmatpush2.xpose.msra.mxu0 0.0
    %1042 = vmatprep.mubr.f32.mxu0 0.0
    %1043 = vmatmul.mubr.f32.gmra.mxu0 %v974
    %v1044 = vpop.f32.mrf.mxu0
    %v1045 = vadd.f32 0.0, %v1044
    %v1046 = vpop.f32.mrf.mxu0
    %1047 = vdwg.mxu0
    %1048 = vrot.lane.b32.xlu0 %v265, 112
    %v1049 = vpop.permute.xlu0 %1048
    %1050 = vrot.lane.b32.xlu0 %v261, 80
    %v1051 = vpop.permute.xlu0 %1050
    %v1052 = vsel %vm296, %v1049, 0
    %v1054 = vsel %vm296, %v1051, 0
    %1056 = vmatprep.subr.mxu0 0.0
    %1057 = vmatpush1.xpose.msra.mxu0 0.0
    %1058 = vmatprep.subr.mxu0 0.0
    %1059 = vmatpush1.xpose.msra.mxu0 0.0
    %1060 = vmatprep.subr.mxu0 0.0
    %1061 = vmatpush1.xpose.msra.mxu0 0.0
    %1062 = vmatprep.subr.mxu0 0.0
    %1063 = vmatpush1.xpose.msra.mxu0 0.0
    %1064 = vmatprep.subr.mxu0 0.0
    %1065 = vmatpush1.xpose.msra.mxu0 0.0
    %1066 = vmatprep.subr.mxu0 0.0
    %1067 = vmatpush1.xpose.msra.mxu0 0.0
    %1068 = vmatprep.subr.mxu0 0.0
    %1069 = vmatpush1.xpose.msra.mxu0 0.0
    %1070 = vmatprep.subr.mxu0 0.0
    %1071 = vmatpush1.xpose.msra.mxu0 0.0
    %1072 = vmatprep.subr.mxu0 0.0
    %1073 = vmatpush1.xpose.msra.mxu0 0.0
    %1074 = vmatprep.subr.mxu0 0.0
    %1075 = vmatpush1.xpose.msra.mxu0 0.0
    %1076 = vmatprep.subr.mxu0 0.0
    %1077 = vmatpush1.xpose.msra.mxu0 0.0
    %1078 = vmatprep.subr.mxu0 0.0
    %1079 = vmatpush1.xpose.msra.mxu0 0.0
    %1080 = vmatprep.subr.mxu0 0.0
    %1081 = vmatpush1.xpose.msra.mxu0 0.0
    %1082 = vmatprep.subr.mxu0 0.0
    %1083 = vmatpush1.xpose.msra.mxu0 0.0
    %1084 = vmatprep.subr.mxu0 0.0
    %1085 = vmatpush1.xpose.msra.mxu0 0.0
    %1086 = vmatprep.subr.mxu0 0.0
    %1087 = vmatpush1.xpose.msra.mxu0 %v1054
    %1088 = vmatprep.subr.mxu0 0.0
    %1089 = vmatpush2.xpose.msra.mxu0 0.0
    %1090 = vmatprep.subr.mxu0 0.0
    %1091 = vmatpush2.xpose.msra.mxu0 0.0
    %1092 = vmatprep.subr.mxu0 0.0
    %1093 = vmatpush2.xpose.msra.mxu0 0.0
    %1094 = vmatprep.subr.mxu0 0.0
    %1095 = vmatpush2.xpose.msra.mxu0 0.0
    %1096 = vmatprep.subr.mxu0 0.0
    %1097 = vmatpush2.xpose.msra.mxu0 0.0
    %1098 = vmatprep.subr.mxu0 0.0
    %1099 = vmatpush2.xpose.msra.mxu0 0.0
    %1100 = vmatprep.subr.mxu0 0.0
    %1101 = vmatpush2.xpose.msra.mxu0 0.0
    %1102 = vmatprep.subr.mxu0 0.0
    %1103 = vmatpush2.xpose.msra.mxu0 0.0
    %1104 = vmatprep.subr.mxu0 0.0
    %1105 = vmatpush2.xpose.msra.mxu0 0.0
    %1106 = vmatprep.subr.mxu0 0.0
    %1107 = vmatpush2.xpose.msra.mxu0 0.0
    %1108 = vmatprep.subr.mxu0 0.0
    %1109 = vmatpush2.xpose.msra.mxu0 0.0
    %1110 = vmatprep.subr.mxu0 0.0
    %1111 = vmatpush2.xpose.msra.mxu0 0.0
    %1112 = vmatprep.subr.mxu0 0.0
    %1113 = vmatpush2.xpose.msra.mxu0 0.0
    %1114 = vmatprep.subr.mxu0 0.0
    %1115 = vmatpush2.xpose.msra.mxu0 0.0
    %1116 = vmatprep.subr.mxu0 0.0
    %1117 = vmatpush2.xpose.msra.mxu0 0.0
    %1118 = vmatprep.subr.mxu0 0.0
    %1119 = vmatpush2.xpose.msra.mxu0 0.0
    %1120 = vmatprep.mubr.f32.mxu0 0.0
    %1121 = vmatmul.mubr.f32.gmra.mxu0 %v1052
    %v1122 = vpop.f32.mrf.mxu0
    %v1123 = vadd.f32 0.0, %v1122
    %v1124 = vpop.f32.mrf.mxu0
    %1125 = vdwg.mxu0
    %v1126 = vsel %vm460, -100000.0, %v1045
    %v1127 = vsel %vm461, -100000.0, %v1123
    %v1128 = vsel %vm296, %v1126, -inf
    %1129 = vmax.xlane.f32.xlu0 %v1128
    %v1130 = vpop.xlane.xlu0 %1129
    %v1131 = vsel %vm296, %v1127, -inf
    %1132 = vmax.xlane.f32.xlu0 %v1131
    %v1133 = vpop.xlane.xlu0 %1132
    %v1134 = vsub.f32 %v1126, %v1130
    %v1135 = vsub.f32 %v1127, %v1133
    %v1136 = vmul.f32 %v1134, 1.442695
    %v1137 = vpow.pop %v1136
    %v1138 = vmul.f32 %v1135, 1.442695
    %v1139 = vpow.pop %v1138
    %v1140 = vsel %vm296, %v1137, 0.0
    %1141 = vadd.xlane.f32.xlu0 %v1140
    %v1142 = vpop.xlane.xlu0 %1141
    %v1143 = vsel %vm296, %v1139, 0.0
    %1144 = vadd.xlane.f32.xlu0 %v1143
    %v1145 = vpop.xlane.xlu0 %1144
    %v1146 = vrcp.pop %v1142
    %v1147 = vmul.f32 %v1137, %v1146
    %v1148 = vrcp.pop %v1145
    %v1149 = vmul.f32 %v1139, %v1148
    %1150 = vrot.lane.b32.xlu0 %v256, 48
    %v1151 = vpop.permute.xlu0 %1150
    %v1154 = vsel %vm296, %v1147, 0
    %1156 = vmatprep.subr.mxu0 0.0
    %1157 = vmatpush1.msra.mxu0 0.0
    %1158 = vmatprep.subr.mxu0 0.0
    %1159 = vmatpush1.msra.mxu0 0.0
    %1160 = vmatprep.subr.mxu0 0.0
    %1161 = vmatpush1.msra.mxu0 0.0
    %1162 = vmatprep.subr.mxu0 0.0
    %1163 = vmatpush1.msra.mxu0 0.0
    %1164 = vmatprep.subr.mxu0 0.0
    %1165 = vmatpush1.msra.mxu0 0.0
    %1166 = vmatprep.subr.mxu0 0.0
    %1167 = vmatpush1.msra.mxu0 0.0
    %1168 = vmatprep.subr.mxu0 0.0
    %1169 = vmatpush1.msra.mxu0 0.0
    %1170 = vmatprep.subr.mxu0 0.0
    %1171 = vmatpush1.msra.mxu0 0.0
    %1172 = vmatprep.subr.mxu0 0.0
    %1173 = vmatpush1.msra.mxu0 0.0
    %1174 = vmatprep.subr.mxu0 0.0
    %1175 = vmatpush1.msra.mxu0 0.0
    %1176 = vmatprep.subr.mxu0 0.0
    %1177 = vmatpush1.msra.mxu0 0.0
    %1178 = vmatprep.subr.mxu0 0.0
    %1179 = vmatpush1.msra.mxu0 0.0
    %1180 = vmatprep.subr.mxu0 0.0
    %1181 = vmatpush1.msra.mxu0 0.0
    %1182 = vmatprep.subr.mxu0 0.0
    %1183 = vmatpush1.msra.mxu0 0.0
    %1184 = vmatprep.subr.mxu0 0.0
    %1185 = vmatpush1.msra.mxu0 0.0
    %1186 = vmatprep.subr.mxu0 0.0
    %1187 = vmatpush1.msra.mxu0 %v1151
    %1188 = vmatprep.subr.mxu0 0.0
    %1189 = vmatpush2.msra.mxu0 0.0
    %1190 = vmatprep.subr.mxu0 0.0
    %1191 = vmatpush2.msra.mxu0 0.0
    %1192 = vmatprep.subr.mxu0 0.0
    %1193 = vmatpush2.msra.mxu0 0.0
    %1194 = vmatprep.subr.mxu0 0.0
    %1195 = vmatpush2.msra.mxu0 0.0
    %1196 = vmatprep.subr.mxu0 0.0
    %1197 = vmatpush2.msra.mxu0 0.0
    %1198 = vmatprep.subr.mxu0 0.0
    %1199 = vmatpush2.msra.mxu0 0.0
    %1200 = vmatprep.subr.mxu0 0.0
    %1201 = vmatpush2.msra.mxu0 0.0
    %1202 = vmatprep.subr.mxu0 0.0
    %1203 = vmatpush2.msra.mxu0 0.0
    %1204 = vmatprep.subr.mxu0 0.0
    %1205 = vmatpush2.msra.mxu0 0.0
    %1206 = vmatprep.subr.mxu0 0.0
    %1207 = vmatpush2.msra.mxu0 0.0
    %1208 = vmatprep.subr.mxu0 0.0
    %1209 = vmatpush2.msra.mxu0 0.0
    %1210 = vmatprep.subr.mxu0 0.0
    %1211 = vmatpush2.msra.mxu0 0.0
    %1212 = vmatprep.subr.mxu0 0.0
    %1213 = vmatpush2.msra.mxu0 0.0
    %1214 = vmatprep.subr.mxu0 0.0
    %1215 = vmatpush2.msra.mxu0 0.0
    %1216 = vmatprep.subr.mxu0 0.0
    %1217 = vmatpush2.msra.mxu0 0.0
    %1218 = vmatprep.subr.mxu0 0.0
    %1219 = vmatpush2.msra.mxu0 0.0
    %1220 = vmatprep.mubr.f32.mxu0 0.0
    %1221 = vmatmul.mubr.f32.gmra.mxu0 %v1154
    %v1222 = vpop.f32.mrf.mxu0
    %v1223 = vadd.f32 0.0, %v1222
    %v1224 = vpop.f32.mrf.mxu0
    %1225 = vdwg.mxu0
    %1226 = vrot.lane.b32.xlu0 %v261, 48
    %v1227 = vpop.permute.xlu0 %1226
    %v1230 = vsel %vm296, %v1149, 0
    %1232 = vmatprep.subr.mxu0 0.0
    %1233 = vmatpush1.msra.mxu0 0.0
    %1234 = vmatprep.subr.mxu0 0.0
    %1235 = vmatpush1.msra.mxu0 0.0
    %1236 = vmatprep.subr.mxu0 0.0
    %1237 = vmatpush1.msra.mxu0 0.0
    %1238 = vmatprep.subr.mxu0 0.0
    %1239 = vmatpush1.msra.mxu0 0.0
    %1240 = vmatprep.subr.mxu0 0.0
    %1241 = vmatpush1.msra.mxu0 0.0
    %1242 = vmatprep.subr.mxu0 0.0
    %1243 = vmatpush1.msra.mxu0 0.0
    %1244 = vmatprep.subr.mxu0 0.0
    %1245 = vmatpush1.msra.mxu0 0.0
    %1246 = vmatprep.subr.mxu0 0.0
    %1247 = vmatpush1.msra.mxu0 0.0
    %1248 = vmatprep.subr.mxu0 0.0
    %1249 = vmatpush1.msra.mxu0 0.0
    %1250 = vmatprep.subr.mxu0 0.0
    %1251 = vmatpush1.msra.mxu0 0.0
    %1252 = vmatprep.subr.mxu0 0.0
    %1253 = vmatpush1.msra.mxu0 0.0
    %1254 = vmatprep.subr.mxu0 0.0
    %1255 = vmatpush1.msra.mxu0 0.0
    %1256 = vmatprep.subr.mxu0 0.0
    %1257 = vmatpush1.msra.mxu0 0.0
    %1258 = vmatprep.subr.mxu0 0.0
    %1259 = vmatpush1.msra.mxu0 0.0
    %1260 = vmatprep.subr.mxu0 0.0
    %1261 = vmatpush1.msra.mxu0 0.0
    %1262 = vmatprep.subr.mxu0 0.0
    %1263 = vmatpush1.msra.mxu0 %v1227
    %1264 = vmatprep.subr.mxu0 0.0
    %1265 = vmatpush2.msra.mxu0 0.0
    %1266 = vmatprep.subr.mxu0 0.0
    %1267 = vmatpush2.msra.mxu0 0.0
    %1268 = vmatprep.subr.mxu0 0.0
    %1269 = vmatpush2.msra.mxu0 0.0
    %1270 = vmatprep.subr.mxu0 0.0
    %1271 = vmatpush2.msra.mxu0 0.0
    %1272 = vmatprep.subr.mxu0 0.0
    %1273 = vmatpush2.msra.mxu0 0.0
    %1274 = vmatprep.subr.mxu0 0.0
    %1275 = vmatpush2.msra.mxu0 0.0
    %1276 = vmatprep.subr.mxu0 0.0
    %1277 = vmatpush2.msra.mxu0 0.0
    %1278 = vmatprep.subr.mxu0 0.0
    %1279 = vmatpush2.msra.mxu0 0.0
    %1280 = vmatprep.subr.mxu0 0.0
    %1281 = vmatpush2.msra.mxu0 0.0
    %1282 = vmatprep.subr.mxu0 0.0
    %1283 = vmatpush2.msra.mxu0 0.0
    %1284 = vmatprep.subr.mxu0 0.0
    %1285 = vmatpush2.msra.mxu0 0.0
    %1286 = vmatprep.subr.mxu0 0.0
    %1287 = vmatpush2.msra.mxu0 0.0
    %1288 = vmatprep.subr.mxu0 0.0
    %1289 = vmatpush2.msra.mxu0 0.0
    %1290 = vmatprep.subr.mxu0 0.0
    %1291 = vmatpush2.msra.mxu0 0.0
    %1292 = vmatprep.subr.mxu0 0.0
    %1293 = vmatpush2.msra.mxu0 0.0
    %1294 = vmatprep.subr.mxu0 0.0
    %1295 = vmatpush2.msra.mxu0 0.0
    %1296 = vmatprep.mubr.f32.mxu0 0.0
    %1297 = vmatmul.mubr.f32.gmra.mxu0 %v1230
    %v1298 = vpop.f32.mrf.mxu0
    %v1299 = vadd.f32 0.0, %v1298
    %v1300 = vpop.f32.mrf.mxu0
    %1301 = vdwg.mxu0
    %1302 = vrot.lane.b32.xlu0 %v264, 104
    %v1303 = vpop.permute.xlu0 %1302
    %1304 = vrot.lane.b32.xlu0 %v256, 72
    %v1305 = vpop.permute.xlu0 %1304
    %v1306 = vsel %vm296, %v1303, 0
    %v1308 = vsel %vm296, %v1305, 0
    %1310 = vmatprep.subr.mxu0 0.0
    %1311 = vmatpush1.xpose.msra.mxu0 0.0
    %1312 = vmatprep.subr.mxu0 0.0
    %1313 = vmatpush1.xpose.msra.mxu0 0.0
    %1314 = vmatprep.subr.mxu0 0.0
    %1315 = vmatpush1.xpose.msra.mxu0 0.0
    %1316 = vmatprep.subr.mxu0 0.0
    %1317 = vmatpush1.xpose.msra.mxu0 0.0
    %1318 = vmatprep.subr.mxu0 0.0
    %1319 = vmatpush1.xpose.msra.mxu0 0.0
    %1320 = vmatprep.subr.mxu0 0.0
    %1321 = vmatpush1.xpose.msra.mxu0 0.0
    %1322 = vmatprep.subr.mxu0 0.0
    %1323 = vmatpush1.xpose.msra.mxu0 0.0
    %1324 = vmatprep.subr.mxu0 0.0
    %1325 = vmatpush1.xpose.msra.mxu0 0.0
    %1326 = vmatprep.subr.mxu0 0.0
    %1327 = vmatpush1.xpose.msra.mxu0 0.0
    %1328 = vmatprep.subr.mxu0 0.0
    %1329 = vmatpush1.xpose.msra.mxu0 0.0
    %1330 = vmatprep.subr.mxu0 0.0
    %1331 = vmatpush1.xpose.msra.mxu0 0.0
    %1332 = vmatprep.subr.mxu0 0.0
    %1333 = vmatpush1.xpose.msra.mxu0 0.0
    %1334 = vmatprep.subr.mxu0 0.0
    %1335 = vmatpush1.xpose.msra.mxu0 0.0
    %1336 = vmatprep.subr.mxu0 0.0
    %1337 = vmatpush1.xpose.msra.mxu0 0.0
    %1338 = vmatprep.subr.mxu0 0.0
    %1339 = vmatpush1.xpose.msra.mxu0 0.0
    %1340 = vmatprep.subr.mxu0 0.0
    %1341 = vmatpush1.xpose.msra.mxu0 %v1308
    %1342 = vmatprep.subr.mxu0 0.0
    %1343 = vmatpush2.xpose.msra.mxu0 0.0
    %1344 = vmatprep.subr.mxu0 0.0
    %1345 = vmatpush2.xpose.msra.mxu0 0.0
    %1346 = vmatprep.subr.mxu0 0.0
    %1347 = vmatpush2.xpose.msra.mxu0 0.0
    %1348 = vmatprep.subr.mxu0 0.0
    %1349 = vmatpush2.xpose.msra.mxu0 0.0
    %1350 = vmatprep.subr.mxu0 0.0
    %1351 = vmatpush2.xpose.msra.mxu0 0.0
    %1352 = vmatprep.subr.mxu0 0.0
    %1353 = vmatpush2.xpose.msra.mxu0 0.0
    %1354 = vmatprep.subr.mxu0 0.0
    %1355 = vmatpush2.xpose.msra.mxu0 0.0
    %1356 = vmatprep.subr.mxu0 0.0
    %1357 = vmatpush2.xpose.msra.mxu0 0.0
    %1358 = vmatprep.subr.mxu0 0.0
    %1359 = vmatpush2.xpose.msra.mxu0 0.0
    %1360 = vmatprep.subr.mxu0 0.0
    %1361 = vmatpush2.xpose.msra.mxu0 0.0
    %1362 = vmatprep.subr.mxu0 0.0
    %1363 = vmatpush2.xpose.msra.mxu0 0.0
    %1364 = vmatprep.subr.mxu0 0.0
    %1365 = vmatpush2.xpose.msra.mxu0 0.0
    %1366 = vmatprep.subr.mxu0 0.0
    %1367 = vmatpush2.xpose.msra.mxu0 0.0
    %1368 = vmatprep.subr.mxu0 0.0
    %1369 = vmatpush2.xpose.msra.mxu0 0.0
    %1370 = vmatprep.subr.mxu0 0.0
    %1371 = vmatpush2.xpose.msra.mxu0 0.0
    %1372 = vmatprep.subr.mxu0 0.0
    %1373 = vmatpush2.xpose.msra.mxu0 0.0
    %1374 = vmatprep.mubr.f32.mxu0 0.0
    %1375 = vmatmul.mubr.f32.gmra.mxu0 %v1306
    %v1376 = vpop.f32.mrf.mxu0
    %v1377 = vadd.f32 0.0, %v1376
    %v1378 = vpop.f32.mrf.mxu0
    %1379 = vdwg.mxu0
    %1380 = vrot.lane.b32.xlu0 %v265, 104
    %v1381 = vpop.permute.xlu0 %1380
    %1382 = vrot.lane.b32.xlu0 %v261, 72
    %v1383 = vpop.permute.xlu0 %1382
    %v1384 = vsel %vm296, %v1381, 0
    %v1386 = vsel %vm296, %v1383, 0
    %1388 = vmatprep.subr.mxu0 0.0
    %1389 = vmatpush1.xpose.msra.mxu0 0.0
    %1390 = vmatprep.subr.mxu0 0.0
    %1391 = vmatpush1.xpose.msra.mxu0 0.0
    %1392 = vmatprep.subr.mxu0 0.0
    %1393 = vmatpush1.xpose.msra.mxu0 0.0
    %1394 = vmatprep.subr.mxu0 0.0
    %1395 = vmatpush1.xpose.msra.mxu0 0.0
    %1396 = vmatprep.subr.mxu0 0.0
    %1397 = vmatpush1.xpose.msra.mxu0 0.0
    %1398 = vmatprep.subr.mxu0 0.0
    %1399 = vmatpush1.xpose.msra.mxu0 0.0
    %1400 = vmatprep.subr.mxu0 0.0
    %1401 = vmatpush1.xpose.msra.mxu0 0.0
    %1402 = vmatprep.subr.mxu0 0.0
    %1403 = vmatpush1.xpose.msra.mxu0 0.0
    %1404 = vmatprep.subr.mxu0 0.0
    %1405 = vmatpush1.xpose.msra.mxu0 0.0
    %1406 = vmatprep.subr.mxu0 0.0
    %1407 = vmatpush1.xpose.msra.mxu0 0.0
    %1408 = vmatprep.subr.mxu0 0.0
    %1409 = vmatpush1.xpose.msra.mxu0 0.0
    %1410 = vmatprep.subr.mxu0 0.0
    %1411 = vmatpush1.xpose.msra.mxu0 0.0
    %1412 = vmatprep.subr.mxu0 0.0
    %1413 = vmatpush1.xpose.msra.mxu0 0.0
    %1414 = vmatprep.subr.mxu0 0.0
    %1415 = vmatpush1.xpose.msra.mxu0 0.0
    %1416 = vmatprep.subr.mxu0 0.0
    %1417 = vmatpush1.xpose.msra.mxu0 0.0
    %1418 = vmatprep.subr.mxu0 0.0
    %1419 = vmatpush1.xpose.msra.mxu0 %v1386
    %1420 = vmatprep.subr.mxu0 0.0
    %1421 = vmatpush2.xpose.msra.mxu0 0.0
    %1422 = vmatprep.subr.mxu0 0.0
    %1423 = vmatpush2.xpose.msra.mxu0 0.0
    %1424 = vmatprep.subr.mxu0 0.0
    %1425 = vmatpush2.xpose.msra.mxu0 0.0
    %1426 = vmatprep.subr.mxu0 0.0
    %1427 = vmatpush2.xpose.msra.mxu0 0.0
    %1428 = vmatprep.subr.mxu0 0.0
    %1429 = vmatpush2.xpose.msra.mxu0 0.0
    %1430 = vmatprep.subr.mxu0 0.0
    %1431 = vmatpush2.xpose.msra.mxu0 0.0
    %1432 = vmatprep.subr.mxu0 0.0
    %1433 = vmatpush2.xpose.msra.mxu0 0.0
    %1434 = vmatprep.subr.mxu0 0.0
    %1435 = vmatpush2.xpose.msra.mxu0 0.0
    %1436 = vmatprep.subr.mxu0 0.0
    %1437 = vmatpush2.xpose.msra.mxu0 0.0
    %1438 = vmatprep.subr.mxu0 0.0
    %1439 = vmatpush2.xpose.msra.mxu0 0.0
    %1440 = vmatprep.subr.mxu0 0.0
    %1441 = vmatpush2.xpose.msra.mxu0 0.0
    %1442 = vmatprep.subr.mxu0 0.0
    %1443 = vmatpush2.xpose.msra.mxu0 0.0
    %1444 = vmatprep.subr.mxu0 0.0
    %1445 = vmatpush2.xpose.msra.mxu0 0.0
    %1446 = vmatprep.subr.mxu0 0.0
    %1447 = vmatpush2.xpose.msra.mxu0 0.0
    %1448 = vmatprep.subr.mxu0 0.0
    %1449 = vmatpush2.xpose.msra.mxu0 0.0
    %1450 = vmatprep.subr.mxu0 0.0
    %1451 = vmatpush2.xpose.msra.mxu0 0.0
    %1452 = vmatprep.mubr.f32.mxu0 0.0
    %1453 = vmatmul.mubr.f32.gmra.mxu0 %v1384
    %v1454 = vpop.f32.mrf.mxu0
    %v1455 = vadd.f32 0.0, %v1454
    %v1456 = vpop.f32.mrf.mxu0
    %1457 = vdwg.mxu0
    %v1458 = vsel %vm460, -100000.0, %v1377
    %v1459 = vsel %vm461, -100000.0, %v1455
    %v1460 = vsel %vm296, %v1458, -inf
    %1461 = vmax.xlane.f32.xlu0 %v1460
    %v1462 = vpop.xlane.xlu0 %1461
    %v1463 = vsel %vm296, %v1459, -inf
    %1464 = vmax.xlane.f32.xlu0 %v1463
    %v1465 = vpop.xlane.xlu0 %1464
    %v1466 = vsub.f32 %v1458, %v1462
    %v1467 = vsub.f32 %v1459, %v1465
    %v1468 = vmul.f32 %v1466, 1.442695
    %v1469 = vpow.pop %v1468
    %v1470 = vmul.f32 %v1467, 1.442695
    %v1471 = vpow.pop %v1470
    %v1472 = vsel %vm296, %v1469, 0.0
    %1473 = vadd.xlane.f32.xlu0 %v1472
    %v1474 = vpop.xlane.xlu0 %1473
    %v1475 = vsel %vm296, %v1471, 0.0
    %1476 = vadd.xlane.f32.xlu0 %v1475
    %v1477 = vpop.xlane.xlu0 %1476
    %v1478 = vrcp.pop %v1474
    %v1479 = vmul.f32 %v1469, %v1478
    %v1480 = vrcp.pop %v1477
    %v1481 = vmul.f32 %v1471, %v1480
    %1482 = vrot.lane.b32.xlu0 %v256, 40
    %v1483 = vpop.permute.xlu0 %1482
    %v1486 = vsel %vm296, %v1479, 0
    %1488 = vmatprep.subr.mxu0 0.0
    %1489 = vmatpush1.msra.mxu0 0.0
    %1490 = vmatprep.subr.mxu0 0.0
    %1491 = vmatpush1.msra.mxu0 0.0
    %1492 = vmatprep.subr.mxu0 0.0
    %1493 = vmatpush1.msra.mxu0 0.0
    %1494 = vmatprep.subr.mxu0 0.0
    %1495 = vmatpush1.msra.mxu0 0.0
    %1496 = vmatprep.subr.mxu0 0.0
    %1497 = vmatpush1.msra.mxu0 0.0
    %1498 = vmatprep.subr.mxu0 0.0
    %1499 = vmatpush1.msra.mxu0 0.0
    %1500 = vmatprep.subr.mxu0 0.0
    %1501 = vmatpush1.msra.mxu0 0.0
    %1502 = vmatprep.subr.mxu0 0.0
    %1503 = vmatpush1.msra.mxu0 0.0
    %1504 = vmatprep.subr.mxu0 0.0
    %1505 = vmatpush1.msra.mxu0 0.0
    %1506 = vmatprep.subr.mxu0 0.0
    %1507 = vmatpush1.msra.mxu0 0.0
    %1508 = vmatprep.subr.mxu0 0.0
    %1509 = vmatpush1.msra.mxu0 0.0
    %1510 = vmatprep.subr.mxu0 0.0
    %1511 = vmatpush1.msra.mxu0 0.0
    %1512 = vmatprep.subr.mxu0 0.0
    %1513 = vmatpush1.msra.mxu0 0.0
    %1514 = vmatprep.subr.mxu0 0.0
    %1515 = vmatpush1.msra.mxu0 0.0
    %1516 = vmatprep.subr.mxu0 0.0
    %1517 = vmatpush1.msra.mxu0 0.0
    %1518 = vmatprep.subr.mxu0 0.0
    %1519 = vmatpush1.msra.mxu0 %v1483
    %1520 = vmatprep.subr.mxu0 0.0
    %1521 = vmatpush2.msra.mxu0 0.0
    %1522 = vmatprep.subr.mxu0 0.0
    %1523 = vmatpush2.msra.mxu0 0.0
    %1524 = vmatprep.subr.mxu0 0.0
    %1525 = vmatpush2.msra.mxu0 0.0
    %1526 = vmatprep.subr.mxu0 0.0
    %1527 = vmatpush2.msra.mxu0 0.0
    %1528 = vmatprep.subr.mxu0 0.0
    %1529 = vmatpush2.msra.mxu0 0.0
    %1530 = vmatprep.subr.mxu0 0.0
    %1531 = vmatpush2.msra.mxu0 0.0
    %1532 = vmatprep.subr.mxu0 0.0
    %1533 = vmatpush2.msra.mxu0 0.0
    %1534 = vmatprep.subr.mxu0 0.0
    %1535 = vmatpush2.msra.mxu0 0.0
    %1536 = vmatprep.subr.mxu0 0.0
    %1537 = vmatpush2.msra.mxu0 0.0
    %1538 = vmatprep.subr.mxu0 0.0
    %1539 = vmatpush2.msra.mxu0 0.0
    %1540 = vmatprep.subr.mxu0 0.0
    %1541 = vmatpush2.msra.mxu0 0.0
    %1542 = vmatprep.subr.mxu0 0.0
    %1543 = vmatpush2.msra.mxu0 0.0
    %1544 = vmatprep.subr.mxu0 0.0
    %1545 = vmatpush2.msra.mxu0 0.0
    %1546 = vmatprep.subr.mxu0 0.0
    %1547 = vmatpush2.msra.mxu0 0.0
    %1548 = vmatprep.subr.mxu0 0.0
    %1549 = vmatpush2.msra.mxu0 0.0
    %1550 = vmatprep.subr.mxu0 0.0
    %1551 = vmatpush2.msra.mxu0 0.0
    %1552 = vmatprep.mubr.f32.mxu0 0.0
    %1553 = vmatmul.mubr.f32.gmra.mxu0 %v1486
    %v1554 = vpop.f32.mrf.mxu0
    %v1555 = vadd.f32 0.0, %v1554
    %v1556 = vpop.f32.mrf.mxu0
    %1557 = vdwg.mxu0
    %1558 = vrot.lane.b32.xlu0 %v261, 40
    %v1559 = vpop.permute.xlu0 %1558
    %v1562 = vsel %vm296, %v1481, 0
    %1564 = vmatprep.subr.mxu0 0.0
    %1565 = vmatpush1.msra.mxu0 0.0
    %1566 = vmatprep.subr.mxu0 0.0
    %1567 = vmatpush1.msra.mxu0 0.0
    %1568 = vmatprep.subr.mxu0 0.0
    %1569 = vmatpush1.msra.mxu0 0.0
    %1570 = vmatprep.subr.mxu0 0.0
    %1571 = vmatpush1.msra.mxu0 0.0
    %1572 = vmatprep.subr.mxu0 0.0
    %1573 = vmatpush1.msra.mxu0 0.0
    %1574 = vmatprep.subr.mxu0 0.0
    %1575 = vmatpush1.msra.mxu0 0.0
    %1576 = vmatprep.subr.mxu0 0.0
    %1577 = vmatpush1.msra.mxu0 0.0
    %1578 = vmatprep.subr.mxu0 0.0
    %1579 = vmatpush1.msra.mxu0 0.0
    %1580 = vmatprep.subr.mxu0 0.0
    %1581 = vmatpush1.msra.mxu0 0.0
    %1582 = vmatprep.subr.mxu0 0.0
    %1583 = vmatpush1.msra.mxu0 0.0
    %1584 = vmatprep.subr.mxu0 0.0
    %1585 = vmatpush1.msra.mxu0 0.0
    %1586 = vmatprep.subr.mxu0 0.0
    %1587 = vmatpush1.msra.mxu0 0.0
    %1588 = vmatprep.subr.mxu0 0.0
    %1589 = vmatpush1.msra.mxu0 0.0
    %1590 = vmatprep.subr.mxu0 0.0
    %1591 = vmatpush1.msra.mxu0 0.0
    %1592 = vmatprep.subr.mxu0 0.0
    %1593 = vmatpush1.msra.mxu0 0.0
    %1594 = vmatprep.subr.mxu0 0.0
    %1595 = vmatpush1.msra.mxu0 %v1559
    %1596 = vmatprep.subr.mxu0 0.0
    %1597 = vmatpush2.msra.mxu0 0.0
    %1598 = vmatprep.subr.mxu0 0.0
    %1599 = vmatpush2.msra.mxu0 0.0
    %1600 = vmatprep.subr.mxu0 0.0
    %1601 = vmatpush2.msra.mxu0 0.0
    %1602 = vmatprep.subr.mxu0 0.0
    %1603 = vmatpush2.msra.mxu0 0.0
    %1604 = vmatprep.subr.mxu0 0.0
    %1605 = vmatpush2.msra.mxu0 0.0
    %1606 = vmatprep.subr.mxu0 0.0
    %1607 = vmatpush2.msra.mxu0 0.0
    %1608 = vmatprep.subr.mxu0 0.0
    %1609 = vmatpush2.msra.mxu0 0.0
    %1610 = vmatprep.subr.mxu0 0.0
    %1611 = vmatpush2.msra.mxu0 0.0
    %1612 = vmatprep.subr.mxu0 0.0
    %1613 = vmatpush2.msra.mxu0 0.0
    %1614 = vmatprep.subr.mxu0 0.0
    %1615 = vmatpush2.msra.mxu0 0.0
    %1616 = vmatprep.subr.mxu0 0.0
    %1617 = vmatpush2.msra.mxu0 0.0
    %1618 = vmatprep.subr.mxu0 0.0
    %1619 = vmatpush2.msra.mxu0 0.0
    %1620 = vmatprep.subr.mxu0 0.0
    %1621 = vmatpush2.msra.mxu0 0.0
    %1622 = vmatprep.subr.mxu0 0.0
    %1623 = vmatpush2.msra.mxu0 0.0
    %1624 = vmatprep.subr.mxu0 0.0
    %1625 = vmatpush2.msra.mxu0 0.0
    %1626 = vmatprep.subr.mxu0 0.0
    %1627 = vmatpush2.msra.mxu0 0.0
    %1628 = vmatprep.mubr.f32.mxu0 0.0
    %1629 = vmatmul.mubr.f32.gmra.mxu0 %v1562
    %v1630 = vpop.f32.mrf.mxu0
    %v1631 = vadd.f32 0.0, %v1630
    %v1632 = vpop.f32.mrf.mxu0
    %1633 = vdwg.mxu0
    %1636 = vrot.lane.b32.xlu0 %v891, 8
    %v1637 = vpop.permute.xlu0 %1636
    %1638 = vrot.lane.b32.xlu0 %v967, 8
    %v1639 = vpop.permute.xlu0 %1638
    %1644 = vrot.lane.b32.xlu0 %v1223, 16
    %v1645 = vpop.permute.xlu0 %1644
    %1646 = vrot.lane.b32.xlu0 %v1299, 16
    %v1647 = vpop.permute.xlu0 %1646
    %1652 = vrot.lane.b32.xlu0 %v1555, 24
    %v1653 = vpop.permute.xlu0 %1652
    %1654 = vrot.lane.b32.xlu0 %v1631, 24
    %v1655 = vpop.permute.xlu0 %1654
    %v1658 = vsel %vm296, %v559, %v1637
    %v1659 = vsel %vm296, %v635, %v1639
    %vm1660 = vcmask 130048
    %v1661 = vsel %vm1660, %v1658, %v1645
    %v1662 = vsel %vm1660, %v1659, %v1647
    %vm1663 = vcmask 195584
    %v1664 = vsel %vm1663, %v1661, %v1653
    %v1665 = vsel %vm1663, %v1662, %v1655
    %v1666 = vld [vmem:[%s6] sm:$0xff]
    %v1667 = vld [vmem:[%s6 + $0x8] sm:$0xff]
    %v1668 = vld [vmem:[%s6 + $0x10] sm:$0xff]
    %v1669 = vld [vmem:[%s6 + $0x18] sm:$0xff]
    %v1670 = vld [vmem:[%s7] sm:$0x1]
    %v1672 = vlaneseq
    %v1673 = vshrl.u32 %v1672, 7
    %v1674 = vsub.s32 0, %v1673
    %v1675 = vrot.slane %v1670, %v1674
    %v1678 = vsel %vm129, %v1664, 0
    %v1681 = vsel %vm129, %v1665, 0
    %1683 = vmatprep.subr.mxu0 0.0
    %1684 = vmatpush1.msra.mxu0 0.0
    %1685 = vmatprep.subr.mxu0 0.0
    %1686 = vmatpush1.msra.mxu0 0.0
    %1687 = vmatprep.subr.mxu0 0.0
    %1688 = vmatpush1.msra.mxu0 0.0
    %1689 = vmatprep.subr.mxu0 0.0
    %1690 = vmatpush1.msra.mxu0 0.0
    %1691 = vmatprep.subr.mxu0 0.0
    %1692 = vmatpush1.msra.mxu0 0.0
    %1693 = vmatprep.subr.mxu0 0.0
    %1694 = vmatpush1.msra.mxu0 0.0
    %1695 = vmatprep.subr.mxu0 0.0
    %1696 = vmatpush1.msra.mxu0 0.0
    %1697 = vmatprep.subr.mxu0 0.0
    %1698 = vmatpush1.msra.mxu0 0.0
    %1699 = vmatprep.subr.mxu0 0.0
    %1700 = vmatpush1.msra.mxu0 0.0
    %1701 = vmatprep.subr.mxu0 0.0
    %1702 = vmatpush1.msra.mxu0 0.0
    %1703 = vmatprep.subr.mxu0 0.0
    %1704 = vmatpush1.msra.mxu0 0.0
    %1705 = vmatprep.subr.mxu0 0.0
    %1706 = vmatpush1.msra.mxu0 0.0
    %1707 = vmatprep.subr.mxu0 0.0
    %1708 = vmatpush1.msra.mxu0 %v1669
    %1709 = vmatprep.subr.mxu0 0.0
    %1710 = vmatpush1.msra.mxu0 %v1668
    %1711 = vmatprep.subr.mxu0 0.0
    %1712 = vmatpush1.msra.mxu0 %v1667
    %1713 = vmatprep.subr.mxu0 0.0
    %1714 = vmatpush1.msra.mxu0 %v1666
    %1715 = vmatprep.subr.mxu0 0.0
    %1716 = vmatpush2.msra.mxu0 0.0
    %1717 = vmatprep.subr.mxu0 0.0
    %1718 = vmatpush2.msra.mxu0 0.0
    %1719 = vmatprep.subr.mxu0 0.0
    %1720 = vmatpush2.msra.mxu0 0.0
    %1721 = vmatprep.subr.mxu0 0.0
    %1722 = vmatpush2.msra.mxu0 0.0
    %1723 = vmatprep.subr.mxu0 0.0
    %1724 = vmatpush2.msra.mxu0 0.0
    %1725 = vmatprep.subr.mxu0 0.0
    %1726 = vmatpush2.msra.mxu0 0.0
    %1727 = vmatprep.subr.mxu0 0.0
    %1728 = vmatpush2.msra.mxu0 0.0
    %1729 = vmatprep.subr.mxu0 0.0
    %1730 = vmatpush2.msra.mxu0 0.0
    %1731 = vmatprep.subr.mxu0 0.0
    %1732 = vmatpush2.msra.mxu0 0.0
    %1733 = vmatprep.subr.mxu0 0.0
    %1734 = vmatpush2.msra.mxu0 0.0
    %1735 = vmatprep.subr.mxu0 0.0
    %1736 = vmatpush2.msra.mxu0 0.0
    %1737 = vmatprep.subr.mxu0 0.0
    %1738 = vmatpush2.msra.mxu0 0.0
    %1739 = vmatprep.subr.mxu0 0.0
    %1740 = vmatpush2.msra.mxu0 0.0
    %1741 = vmatprep.subr.mxu0 0.0
    %1742 = vmatpush2.msra.mxu0 0.0
    %1743 = vmatprep.subr.mxu0 0.0
    %1744 = vmatpush2.msra.mxu0 0.0
    %1745 = vmatprep.subr.mxu0 0.0
    %1746 = vmatpush2.msra.mxu0 0.0
    %1747 = vmatprep.mubr.f32.mxu0 0.0
    %1748 = vmatmul.mubr.f32.gmra.mxu0 %v1678
    %v1749 = vpop.f32.mrf.mxu0
    %v1750 = vadd.f32 %v1675, %v1749
    %v1751 = vpop.f32.mrf.mxu0
    %1752 = vmatprep.mubr.f32.mxu0 0.0
    %1753 = vmatmul.mubr.f32.gmra.mxu0 %v1681
    %v1754 = vpop.f32.mrf.mxu0
    %v1755 = vadd.f32 %v1675, %v1754
    %v1756 = vpop.f32.mrf.mxu0
    %1757 = vdwg.mxu0
    %v1758 = vadd.f32 %v110, %v1750
    %v1759 = vadd.f32 %v125, %v1755
    %v1760 = vld [vmem:[%s8] sm:$0x1]
    %v1761 = vld [vmem:[%s9] sm:$0x1]
    %v1762 = vsel %vm129, %v1758, 0.0
    %1763 = vadd.xlane.f32.xlu0 %v1762
    %v1764 = vpop.xlane.xlu0 %1763
    %v1765 = vsel %vm129, %v1759, 0.0
    %1766 = vadd.xlane.f32.xlu0 %v1765
    %v1767 = vpop.xlane.xlu0 %1766
    %v1768 = vmul.f32 %v1764, 0.03125
    %v1769 = vmul.f32 %v1767, 0.03125
    %v1770 = vsub.f32 %v1758, %v1768
    %v1771 = vsub.f32 %v1759, %v1769
    %v1772 = vmul.f32 %v1770, %v1770
    %v1773 = vmul.f32 %v1771, %v1771
    %v1774 = vsel %vm129, %v1772, 0.0
    %1775 = vadd.xlane.f32.xlu0 %v1774
    %v1776 = vpop.xlane.xlu0 %1775
    %v1777 = vsel %vm129, %v1773, 0.0
    %1778 = vadd.xlane.f32.xlu0 %v1777
    %v1779 = vpop.xlane.xlu0 %1778
    %v1780 = vmul.f32 %v1776, 0.03125
    %v1781 = vmul.f32 %v1779, 0.03125
    %v1782 = vadd.f32 %v1780, 1e-05
    %v1783 = vadd.f32 %v1781, 1e-05
    %v1784 = vrsqrt.pop %v1782
    %v1785 = vrsqrt.pop %v1783
    %v1786 = vmul.f32 %v1770, %v1784
    %v1787 = vmul.f32 %v1771, %v1785
    %v1789 = vlaneseq
    %v1790 = vshrl.u32 %v1789, 7
    %v1791 = vsub.s32 0, %v1790
    %v1792 = vrot.slane %v1760, %v1791
    %v1794 = vmul.f32 %v1786, %v1792
    %v1795 = vmul.f32 %v1787, %v1792
    %v1797 = vlaneseq
    %v1798 = vshrl.u32 %v1797, 7
    %v1799 = vsub.s32 0, %v1798
    %v1800 = vrot.slane %v1761, %v1799
    %v1802 = vadd.f32 %v1794, %v1800
    %v1803 = vadd.f32 %v1795, %v1800
    %v1804 = vld [vmem:[%s10] sm:$0xff]
    %v1805 = vld [vmem:[%s10 + $0x8] sm:$0xff]
    %v1806 = vld [vmem:[%s10 + $0x10] sm:$0xff]
    %v1807 = vld [vmem:[%s10 + $0x18] sm:$0xff]
    %v1808 = vld [vmem:[%s11] sm:$0x1]
    %v1810 = vlaneseq
    %v1811 = vshrl.u32 %v1810, 7
    %v1812 = vsub.s32 0, %v1811
    %v1813 = vrot.slane %v1808, %v1812
    %v1816 = vsel %vm129, %v1802, 0
    %v1819 = vsel %vm129, %v1803, 0
    %1821 = vmatprep.subr.mxu0 0.0
    %1822 = vmatpush1.msra.mxu0 0.0
    %1823 = vmatprep.subr.mxu0 0.0
    %1824 = vmatpush1.msra.mxu0 0.0
    %1825 = vmatprep.subr.mxu0 0.0
    %1826 = vmatpush1.msra.mxu0 0.0
    %1827 = vmatprep.subr.mxu0 0.0
    %1828 = vmatpush1.msra.mxu0 0.0
    %1829 = vmatprep.subr.mxu0 0.0
    %1830 = vmatpush1.msra.mxu0 0.0
    %1831 = vmatprep.subr.mxu0 0.0
    %1832 = vmatpush1.msra.mxu0 0.0
    %1833 = vmatprep.subr.mxu0 0.0
    %1834 = vmatpush1.msra.mxu0 0.0
    %1835 = vmatprep.subr.mxu0 0.0
    %1836 = vmatpush1.msra.mxu0 0.0
    %1837 = vmatprep.subr.mxu0 0.0
    %1838 = vmatpush1.msra.mxu0 0.0
    %1839 = vmatprep.subr.mxu0 0.0
    %1840 = vmatpush1.msra.mxu0 0.0
    %1841 = vmatprep.subr.mxu0 0.0
    %1842 = vmatpush1.msra.mxu0 0.0
    %1843 = vmatprep.subr.mxu0 0.0
    %1844 = vmatpush1.msra.mxu0 0.0
    %1845 = vmatprep.subr.mxu0 0.0
    %1846 = vmatpush1.msra.mxu0 %v1807
    %1847 = vmatprep.subr.mxu0 0.0
    %1848 = vmatpush1.msra.mxu0 %v1806
    %1849 = vmatprep.subr.mxu0 0.0
    %1850 = vmatpush1.msra.mxu0 %v1805
    %1851 = vmatprep.subr.mxu0 0.0
    %1852 = vmatpush1.msra.mxu0 %v1804
    %1853 = vmatprep.subr.mxu0 0.0
    %1854 = vmatpush2.msra.mxu0 0.0
    %1855 = vmatprep.subr.mxu0 0.0
    %1856 = vmatpush2.msra.mxu0 0.0
    %1857 = vmatprep.subr.mxu0 0.0
    %1858 = vmatpush2.msra.mxu0 0.0
    %1859 = vmatprep.subr.mxu0 0.0
    %1860 = vmatpush2.msra.mxu0 0.0
    %1861 = vmatprep.subr.mxu0 0.0
    %1862 = vmatpush2.msra.mxu0 0.0
    %1863 = vmatprep.subr.mxu0 0.0
    %1864 = vmatpush2.msra.mxu0 0.0
    %1865 = vmatprep.subr.mxu0 0.0
    %1866 = vmatpush2.msra.mxu0 0.0
    %1867 = vmatprep.subr.mxu0 0.0
    %1868 = vmatpush2.msra.mxu0 0.0
    %1869 = vmatprep.subr.mxu0 0.0
    %1870 = vmatpush2.msra.mxu0 0.0
    %1871 = vmatprep.subr.mxu0 0.0
    %1872 = vmatpush2.msra.mxu0 0.0
    %1873 = vmatprep.subr.mxu0 0.0
    %1874 = vmatpush2.msra.mxu0 0.0
    %1875 = vmatprep.subr.mxu0 0.0
    %1876 = vmatpush2.msra.mxu0 0.0
    %1877 = vmatprep.subr.mxu0 0.0
    %1878 = vmatpush2.msra.mxu0 0.0
    %1879 = vmatprep.subr.mxu0 0.0
    %1880 = vmatpush2.msra.mxu0 0.0
    %1881 = vmatprep.subr.mxu0 0.0
    %1882 = vmatpush2.msra.mxu0 0.0
    %1883 = vmatprep.subr.mxu0 0.0
    %1884 = vmatpush2.msra.mxu0 0.0
    %1885 = vmatprep.mubr.f32.mxu0 0.0
    %1886 = vmatmul.mubr.f32.gmra.mxu0 %v1816
    %v1887 = vpop.f32.mrf.mxu0
    %v1888 = vadd.f32 %v1813, %v1887
    %v1889 = vpop.f32.mrf.mxu0
    %1890 = vmatprep.mubr.f32.mxu0 0.0
    %1891 = vmatmul.mubr.f32.gmra.mxu0 %v1819
    %v1892 = vpop.f32.mrf.mxu0
    %v1893 = vadd.f32 %v1813, %v1892
    %v1894 = vpop.f32.mrf.mxu0
    %1895 = vdwg.mxu0
    %v1896 = vmax.f32 %v1888, 0.0
    %v1897 = vmax.f32 %v1893, 0.0
    %v1898 = vld [vmem:[%s12] sm:$0xff]
    %v1899 = vld [vmem:[%s12 + $0x8] sm:$0xff]
    %v1900 = vld [vmem:[%s12 + $0x10] sm:$0xff]
    %v1901 = vld [vmem:[%s12 + $0x18] sm:$0xff]
    %v1902 = vld [vmem:[%s12 + $0x20] sm:$0xff]
    %v1903 = vld [vmem:[%s12 + $0x28] sm:$0xff]
    %v1904 = vld [vmem:[%s12 + $0x30] sm:$0xff]
    %v1905 = vld [vmem:[%s12 + $0x38] sm:$0xff]
    %v1906 = vld [vmem:[%s13] sm:$0x1]
    %v1908 = vlaneseq
    %v1909 = vshrl.u32 %v1908, 7
    %v1910 = vsub.s32 0, %v1909
    %v1911 = vrot.slane %v1906, %v1910
    %vm1913 = vcmask 523264
    %v1915 = vsel %vm1913, %v1896, 0
    %v1918 = vsel %vm1913, %v1897, 0
    %1920 = vmatprep.subr.mxu0 0.0
    %1921 = vmatpush1.msra.mxu0 0.0
    %1922 = vmatprep.subr.mxu0 0.0
    %1923 = vmatpush1.msra.mxu0 0.0
    %1924 = vmatprep.subr.mxu0 0.0
    %1925 = vmatpush1.msra.mxu0 0.0
    %1926 = vmatprep.subr.mxu0 0.0
    %1927 = vmatpush1.msra.mxu0 0.0
    %1928 = vmatprep.subr.mxu0 0.0
    %1929 = vmatpush1.msra.mxu0 0.0
    %1930 = vmatprep.subr.mxu0 0.0
    %1931 = vmatpush1.msra.mxu0 0.0
    %1932 = vmatprep.subr.mxu0 0.0
    %1933 = vmatpush1.msra.mxu0 0.0
    %1934 = vmatprep.subr.mxu0 0.0
    %1935 = vmatpush1.msra.mxu0 0.0
    %1936 = vmatprep.subr.mxu0 0.0
    %1937 = vmatpush1.msra.mxu0 %v1905
    %1938 = vmatprep.subr.mxu0 0.0
    %1939 = vmatpush1.msra.mxu0 %v1904
    %1940 = vmatprep.subr.mxu0 0.0
    %1941 = vmatpush1.msra.mxu0 %v1903
    %1942 = vmatprep.subr.mxu0 0.0
    %1943 = vmatpush1.msra.mxu0 %v1902
    %1944 = vmatprep.subr.mxu0 0.0
    %1945 = vmatpush1.msra.mxu0 %v1901
    %1946 = vmatprep.subr.mxu0 0.0
    %1947 = vmatpush1.msra.mxu0 %v1900
    %1948 = vmatprep.subr.mxu0 0.0
    %1949 = vmatpush1.msra.mxu0 %v1899
    %1950 = vmatprep.subr.mxu0 0.0
    %1951 = vmatpush1.msra.mxu0 %v1898
    %1952 = vmatprep.subr.mxu0 0.0
    %1953 = vmatpush2.msra.mxu0 0.0
    %1954 = vmatprep.subr.mxu0 0.0
    %1955 = vmatpush2.msra.mxu0 0.0
    %1956 = vmatprep.subr.mxu0 0.0
    %1957 = vmatpush2.msra.mxu0 0.0
    %1958 = vmatprep.subr.mxu0 0.0
    %1959 = vmatpush2.msra.mxu0 0.0
    %1960 = vmatprep.subr.mxu0 0.0
    %1961 = vmatpush2.msra.mxu0 0.0
    %1962 = vmatprep.subr.mxu0 0.0
    %1963 = vmatpush2.msra.mxu0 0.0
    %1964 = vmatprep.subr.mxu0 0.0
    %1965 = vmatpush2.msra.mxu0 0.0
    %1966 = vmatprep.subr.mxu0 0.0
    %1967 = vmatpush2.msra.mxu0 0.0
    %1968 = vmatprep.subr.mxu0 0.0
    %1969 = vmatpush2.msra.mxu0 0.0
    %1970 = vmatprep.subr.mxu0 0.0
    %1971 = vmatpush2.msra.mxu0 0.0
    %1972 = vmatprep.subr.mxu0 0.0
    %1973 = vmatpush2.msra.mxu0 0.0
    %1974 = vmatprep.subr.mxu0 0.0
    %1975 = vmatpush2.msra.mxu0 0.0
    %1976 = vmatprep.subr.mxu0 0.0
    %1977 = vmatpush2.msra.mxu0 0.0
    %1978 = vmatprep.subr.mxu0 0.0
    %1979 = vmatpush2.msra.mxu0 0.0
    %1980 = vmatprep.subr.mxu0 0.0
    %1981 = vmatpush2.msra.mxu0 0.0
    %1982 = vmatprep.subr.mxu0 0.0
    %1983 = vmatpush2.msra.mxu0 0.0
    %1984 = vmatprep.mubr.f32.mxu0 0.0
    %1985 = vmatmul.mubr.f32.gmra.mxu0 %v1915
    %v1986 = vpop.f32.mrf.mxu0
    %v1987 = vadd.f32 %v1911, %v1986
    %v1988 = vpop.f32.mrf.mxu0
    %1989 = vmatprep.mubr.f32.mxu0 0.0
    %1990 = vmatmul.mubr.f32.gmra.mxu0 %v1918
    %v1991 = vpop.f32.mrf.mxu0
    %v1992 = vadd.f32 %v1911, %v1991
    %v1993 = vpop.f32.mrf.mxu0
    %1994 = vdwg.mxu0
    %v1995 = vadd.f32 %v1758, %v1987
    %v1996 = vadd.f32 %v1759, %v1992
    %v1998 = vcombine.high %v1995, %v1995
    %v2000 = vunpack.c.l.s4 1966171168
    %v2001 = vunpack.c.0.s8 %v2000
    %v2002 = vlaneseq
    %v2003 = vshrl.u32 %v2002, 7
    %v2004 = vsub.s32 %v2001, %v2003
    %v2005 = vrot.slane %v1995, %v2004
    %v2007 = vunpack.c.l.s4 1966171168
    %v2008 = vunpack.c.0.s8 %v2007
    %v2009 = vlaneseq
    %v2010 = vshrl.u32 %v2009, 7
    %v2011 = vsub.s32 %v2008, %v2010
    %v2012 = vrot.slane %v1998, %v2011
    %v2013 = vcombine.high %v2005, %v2005
    %v2014 = vcombine.high %v2012, %v2012
    %v2016 = vunpack.c.l.s4 1966171168
    %v2017 = vunpack.c.0.s8 %v2016
    %v2018 = vlaneseq
    %v2019 = vshrl.u32 %v2018, 7
    %v2020 = vsub.s32 %v2017, %v2019
    %v2021 = vrot.slane %v2005, %v2020
    %v2023 = vunpack.c.l.s4 1966171168
    %v2024 = vunpack.c.0.s8 %v2023
    %v2025 = vlaneseq
    %v2026 = vshrl.u32 %v2025, 7
    %v2027 = vsub.s32 %v2024, %v2026
    %v2028 = vrot.slane %v2012, %v2027
    %v2030 = vunpack.c.l.s4 1966171168
    %v2031 = vunpack.c.0.s8 %v2030
    %v2032 = vlaneseq
    %v2033 = vshrl.u32 %v2032, 7
    %v2034 = vsub.s32 %v2031, %v2033
    %v2035 = vrot.slane %v2013, %v2034
    %v2037 = vunpack.c.l.s4 1966171168
    %v2038 = vunpack.c.0.s8 %v2037
    %v2039 = vlaneseq
    %v2040 = vshrl.u32 %v2039, 7
    %v2041 = vsub.s32 %v2038, %v2040
    %v2042 = vrot.slane %v2014, %v2041
    %v2043 = vcombine.high %v2021, %v2021
    %v2044 = vcombine.high %v2028, %v2028
    %v2045 = vcombine.high %v2035, %v2035
    %v2046 = vcombine.high %v2042, %v2042
    %v2056 = vcombine.high %v1996, %v1996
    %v2058 = vunpack.c.l.s4 1966171168
    %v2059 = vunpack.c.0.s8 %v2058
    %v2060 = vlaneseq
    %v2061 = vshrl.u32 %v2060, 7
    %v2062 = vsub.s32 %v2059, %v2061
    %v2063 = vrot.slane %v1996, %v2062
    %v2065 = vunpack.c.l.s4 1966171168
    %v2066 = vunpack.c.0.s8 %v2065
    %v2067 = vlaneseq
    %v2068 = vshrl.u32 %v2067, 7
    %v2069 = vsub.s32 %v2066, %v2068
    %v2070 = vrot.slane %v2056, %v2069
    %v2071 = vcombine.high %v2063, %v2063
    %v2072 = vcombine.high %v2070, %v2070
    %v2074 = vunpack.c.l.s4 1966171168
    %v2075 = vunpack.c.0.s8 %v2074
    %v2076 = vlaneseq
    %v2077 = vshrl.u32 %v2076, 7
    %v2078 = vsub.s32 %v2075, %v2077
    %v2079 = vrot.slane %v2063, %v2078
    %v2081 = vunpack.c.l.s4 1966171168
    %v2082 = vunpack.c.0.s8 %v2081
    %v2083 = vlaneseq
    %v2084 = vshrl.u32 %v2083, 7
    %v2085 = vsub.s32 %v2082, %v2084
    %v2086 = vrot.slane %v2070, %v2085
    %v2088 = vunpack.c.l.s4 1966171168
    %v2089 = vunpack.c.0.s8 %v2088
    %v2090 = vlaneseq
    %v2091 = vshrl.u32 %v2090, 7
    %v2092 = vsub.s32 %v2089, %v2091
    %v2093 = vrot.slane %v2071, %v2092
    %v2095 = vunpack.c.l.s4 1966171168
    %v2096 = vunpack.c.0.s8 %v2095
    %v2097 = vlaneseq
    %v2098 = vshrl.u32 %v2097, 7
    %v2099 = vsub.s32 %v2096, %v2098
    %v2100 = vrot.slane %v2072, %v2099
    %v2101 = vcombine.high %v2079, %v2079
    %v2102 = vcombine.high %v2086, %v2086
    %v2103 = vcombine.high %v2093, %v2093
    %v2104 = vcombine.high %v2100, %v2100
    %v2105 = vlaneseq
    %v2106 = vshrl.u32 %v2105, 7
    %v2107 = vsub.s32 0, %v2106
    %v2108 = vrot.slane %v2079, %v2107
    %v2109 = vlaneseq
    %v2110 = vshrl.u32 %v2109, 7
    %v2111 = vsub.s32 0, %v2110
    %v2112 = vrot.slane %v2093, %v2111
    %v2113 = vlaneseq
    %v2114 = vshrl.u32 %v2113, 7
    %v2115 = vsub.s32 0, %v2114
    %v2116 = vrot.slane %v2101, %v2115
    %v2117 = vlaneseq
    %v2118 = vshrl.u32 %v2117, 7
    %v2119 = vsub.s32 0, %v2118
    %v2120 = vrot.slane %v2103, %v2119
    %v2121 = vlaneseq
    %v2122 = vshrl.u32 %v2121, 7
    %v2123 = vsub.s32 0, %v2122
    %v2124 = vrot.slane %v2086, %v2123
    %v2125 = vlaneseq
    %v2126 = vshrl.u32 %v2125, 7
    %v2127 = vsub.s32 0, %v2126
    %v2128 = vrot.slane %v2100, %v2127
    %v2129 = vlaneseq
    %v2130 = vshrl.u32 %v2129, 7
    %v2131 = vsub.s32 0, %v2130
    %v2132 = vrot.slane %v2102, %v2131
    %v2133 = vlaneseq
    %v2134 = vshrl.u32 %v2133, 7
    %v2135 = vsub.s32 0, %v2134
    %v2136 = vrot.slane %v2104, %v2135
    %vm2145 = vcmask 1040384
    %v2146 = vsel %vm2145, %v2021, %v2108
    %v2147 = vsel %vm2145, %v2035, %v2112
    %v2148 = vsel %vm2145, %v2043, %v2116
    %v2149 = vsel %vm2145, %v2045, %v2120
    %v2150 = vsel %vm2145, %v2028, %v2124
    %v2151 = vsel %vm2145, %v2042, %v2128
    %v2152 = vsel %vm2145, %v2044, %v2132
    %v2153 = vsel %vm2145, %v2046, %v2136
    %vm2154 = vcmask 254976
    %2155 = vst.msk [vmem:[#allocation7] sm:$0x3] %vm2154, %v2146
    %2156 = vst.msk [vmem:[#allocation7 + $0x2] sm:$0x3] %vm2154, %v2147
    %2157 = vst.msk [vmem:[#allocation7 + $0x4] sm:$0x3] %vm2154, %v2148
    %2158 = vst.msk [vmem:[#allocation7 + $0x6] sm:$0x3] %vm2154, %v2149
    %2159 = vst.msk [vmem:[#allocation7 + $0x8] sm:$0x3] %vm2154, %v2150
    %2160 = vst.msk [vmem:[#allocation7 + $0xa] sm:$0x3] %vm2154, %v2151
    %2161 = vst.msk [vmem:[#allocation7 + $0xc] sm:$0x3] %vm2154, %v2152
    %2162 = vst.msk [vmem:[#allocation7 + $0xe] sm:$0x3] %vm2154, %v2153
    // Predicated region
    $region66: #{tpu_custom_call.1} parent=1 // pred_check
      _
    $region67: #{tpu_custom_call.1} parent=1 // pred_check_branch
      %2164 = sbr.rel (0) target = $region69
    $region68: #{tpu_custom_call.1} parent=1 // pred_region
      %s2166 = ssub.s32 256, 256
      %2167 = vsyncadd [#allocation4], %s2166
      %s2168 = sshll.u32 [#allocation7], 4
      %s2169 = int_to_ptr.vmem [resolvable:$true] %s2168
      %2174 = dma.vmem_to_hbm [thread:$0]  %s2169, 256, %s14, [#allocation4], 32, 32, 2
    $region69: #{tpu_custom_call.1} parent=1 // pred_fallthru
      _
    // Predicated region
    $region70: #{tpu_custom_call.1} parent=1 // pred_check
      _
    $region71: #{tpu_custom_call.1} parent=1 // pred_check_branch
      %2176 = sbr.rel (0) target = $region73
    $region72: #{tpu_custom_call.1} parent=1 // pred_region
      %2177 = dma.done [#allocation4], 256
    $region73: #{tpu_custom_call.1} parent=1 // pred_fallthru
      _
    %2178 = vsyncpa [#allocation3], 1
    %2179 = vsyncpa [#allocation6], 1
    %2180 = vsyncpa [#allocation4], 1

</llo_original>
